<compile_context>
chip_gen: v7x
topology: tpu7x:2x2x1
jax: 0.10.0
libtpu: 0.0.40
codegen_flags: <defaults>
</compile_context>

<pallas_src>
import jax
import jax.numpy as jnp
from jax.experimental import pallas as pl
from jax.experimental.pallas import tpu as pltpu

_K = 7          # conv kernel size
_PAD = (_K - 1) // 2


def _round_up(v, m):
    return (v + m - 1) // m * m


def _make_attention_gate_kernel(C, H, W):
    Hp, Wp = H + 2 * _PAD, W + 2 * _PAD

    def kernel(x_ref, w_ref, b_ref, out_ref, pad_ref):
        # x_ref / out_ref: (C, H, W) VMEM tile (batch dim squeezed by BlockSpec)
        # w_ref: (2*7*7,) f32 SMEM (BN-folded conv weights, (c, ky, kx) order)
        # b_ref: (1,)     f32 SMEM (BN-folded bias)
        # pad_ref: (2, H+6, W+6) f32 VMEM scratch (zero-padded ZPool maps)
        x = x_ref[...]                                            # (C, H, W), native dtype

        # --- ZPool: channel-wise max and mean ---------------------------------
        cmax = jnp.max(x, axis=0).astype(jnp.float32)             # (H, W)
        cmean = jnp.sum(x.astype(jnp.float32), axis=0) * jnp.float32(1.0 / C)

        # --- zero-padded 2-channel map in VMEM scratch ------------------------
        pad_ref[...] = jnp.zeros((2, Hp, Wp), jnp.float32)        # tiny: 2*(H+6)*(W+6)
        pad_ref[0, _PAD:_PAD + H, _PAD:_PAD + W] = cmax
        pad_ref[1, _PAD:_PAD + H, _PAD:_PAD + W] = cmean

        # --- 7x7 conv (2->1 channel), BN folded, as 98 VPU scale-add taps -----
        bias = b_ref[0]                                           # read once (hoisted)
        parts = []
        for c in range(2):                                        # 4 independent chains
            for ky_range in (range(0, 4), range(4, _K)):
                part = jnp.zeros((H, W), dtype=jnp.float32)
                for ky in ky_range:
                    for kx in range(_K):
                        w_tap = w_ref[(c * _K + ky) * _K + kx]    # SMEM scalar
                        part = part + pad_ref[c, ky:ky + H, kx:kx + W] * w_tap
                parts.append(part)
        acc = (parts[0] + parts[1]) + (parts[2] + parts[3]) + bias

        # --- sigmoid gate (EUP) and broadcast multiply -------------------------
        scale = jax.nn.sigmoid(acc)                               # (H, W)
        out_ref[...] = (x * scale.astype(x.dtype)[None, :, :]).astype(out_ref.dtype)

    return kernel


def attention_gate_forward(x, conv_w, gamma, beta, mean, var, eps=1e-5):
    """x: (N, C, H, W). conv_w: (1, 2, 7, 7) OIHW. gamma/beta/mean/var: (1,) BN params."""
    N, C, H, W = x.shape
    itemsize = jnp.dtype(x.dtype).itemsize

    # Fold BatchNorm (eval mode) into the conv: y = conv(zc, w*s) + (beta - mean*s)
    s = gamma / jnp.sqrt(var + eps)                               # (1,)
    w_f = (conv_w * s.reshape(-1, 1, 1, 1))[0].reshape(-1)        # (2*7*7,)
    w_f = w_f.astype(jnp.float32)
    b_f = (beta - mean * s).reshape(1).astype(jnp.float32)        # (1,)

    kernel = _make_attention_gate_kernel(C, H, W)
    smem_spec = pl.BlockSpec(memory_space=pltpu.MemorySpace.SMEM)

    # --- VMEM budget: account for (8,128) tile padding of the (H, W) planes ----
    padded_plane = _round_up(H, 8) * _round_up(W, 128)
    tile_bytes = C * padded_plane * itemsize                      # one (C,H,W) tile in VMEM
    scratch_bytes = 2 * _round_up(H + 2 * _PAD, 8) * _round_up(W + 2 * _PAD, 128) * 4
    # in + out tiles, each double-buffered by the pipeline, + scratch + slack
    need = 2 * 2 * tile_bytes + scratch_bytes + (4 << 20)
    vmem_limit = int(min(max(need, 16 << 20), 64 << 20))          # safe on v7x (64 MiB)

    # Advisory cost hint for XLA's scheduler around the custom call.
    flops_per_image = (2 * C * H * W                # ZPool max + sum
                       + 2 * 2 * _K * _K * H * W    # conv taps (mul + add)
                       + C * H * W)                 # gating multiply
    cost = pl.CostEstimate(
        flops=N * flops_per_image,
        transcendentals=N * H * W,                  # sigmoid
        bytes_accessed=2 * N * C * H * W * itemsize,
    )

    out = pl.pallas_call(
        kernel,
        out_shape=jax.ShapeDtypeStruct((N, C, H, W), x.dtype),
        grid=(N,),
        in_specs=[
            pl.BlockSpec((None, C, H, W), lambda n: (n, 0, 0, 0)),   # x tile (batch squeezed)
            smem_spec,                                               # folded conv weights
            smem_spec,                                               # folded bias
        ],
        out_specs=pl.BlockSpec((None, C, H, W), lambda n: (n, 0, 0, 0)),
        scratch_shapes=[pltpu.VMEM((2, H + 2 * _PAD, W + 2 * _PAD), jnp.float32)],
        compiler_params=pltpu.CompilerParams(
            dimension_semantics=("parallel",),        # shard batch over v7x's 2 TCs
            vmem_limit_bytes=vmem_limit,
        ),
        cost_estimate=cost,
    )(x, w_f, b_f)
    return out


# ----------------------- pure-JAX reference (unfolded BN, for sanity check) -----------------------

def attention_gate_reference(x, conv_w, gamma, beta, mean, var, eps=1e-5):
    cmax = jnp.max(x, axis=1, keepdims=True)
    cmean = jnp.mean(x, axis=1, keepdims=True)
    zc = jnp.concatenate([cmax, cmean], axis=1)                   # (N, 2, H, W)
    y = jax.lax.conv_general_dilated(
        zc, conv_w, window_strides=(1, 1),
        padding=[(_PAD, _PAD), (_PAD, _PAD)],
        dimension_numbers=("NCHW", "OIHW", "NCHW"))
    rs = lambda v: v.reshape(1, -1, 1, 1)
    y = (y - rs(mean)) / jnp.sqrt(rs(var) + eps) * rs(gamma) + rs(beta)
    scale = jax.nn.sigmoid(y)
    return x * scale


if __name__ == "__main__":
    key = jax.random.PRNGKey(0)
    k_x, k_w, k_g, k_b, k_m, k_v = jax.random.split(key, 6)

    N, C, H, W = 2, 4, 16, 16
    x = jax.random.normal(k_x, (N, C, H, W), jnp.float32)

    # Conv2d(2, 1, 7, padding=3, bias=False) + BatchNorm2d(1) params (eval mode)
    conv_w = 0.3 * jax.random.normal(k_w, (1, 2, _K, _K), jnp.float32)
    gamma = 1.0 + 0.1 * jax.random.normal(k_g, (1,), jnp.float32)
    beta = 0.1 * jax.random.normal(k_b, (1,), jnp.float32)
    mean = 0.1 * jax.random.normal(k_m, (1,), jnp.float32)
    var = 0.9 + 0.1 * jnp.abs(jax.random.normal(k_v, (1,), jnp.float32))

    out = attention_gate_forward(x, conv_w, gamma, beta, mean, var)
    out = jax.block_until_ready(out)

    ref = jax.block_until_ready(attention_gate_reference(x, conv_w, gamma, beta, mean, var))
    assert out.shape == (N, C, H, W)
    assert jnp.allclose(out, ref, atol=1e-3, rtol=1e-3), "Pallas output mismatch vs reference"

    print("KERNEL_OK")
</pallas_src>

<mosaic_0001>
module attributes {stable_mosaic.version = 11 : i64} {
  func.func @kernel(%arg0: i32, %arg1: memref<1x4x16x16xf32, #tpu.memory_space<vmem>>, %arg2: memref<98xf32, #tpu.memory_space<smem>>, %arg3: memref<1xf32, #tpu.memory_space<smem>>, %arg4: memref<1x4x16x16xf32, #tpu.memory_space<vmem>>, %arg5: memref<2x22x22xf32, #tpu.memory_space<vmem>>) attributes {dimension_semantics = [#tpu.dimension_semantics<parallel>], iteration_bounds = array<i64: 2>, scalar_prefetch = 0 : i64, scratch_operands = 1 : i64, tpu.core_type = #tpu.core_type<tc>, window_params = [{transform_indices = @transform_0, window_bounds = array<i64: 1, 4, 16, 16>}, {transform_indices = @transform_1, window_bounds = array<i64: 98>}, {transform_indices = @transform_2, window_bounds = array<i64: 1>}, {transform_indices = @transform_3, window_bounds = array<i64: 1, 4, 16, 16>}]} {
    %c0 = arith.constant 0 : index
    %c0_0 = arith.constant 0 : index
    %c0_1 = arith.constant 0 : index
    %c0_2 = arith.constant 0 : index
    %0 = vector.load %arg1[%c0, %c0_0, %c0_1, %c0_2] : memref<1x4x16x16xf32, #tpu.memory_space<vmem>>, vector<1x4x16x16xf32>
    %1 = vector.shape_cast %0 : vector<1x4x16x16xf32> to vector<4x16x16xf32>
    %cst = arith.constant dense<0xFF800000> : vector<16x16xf32>
    %2 = vector.multi_reduction <maximumf>, %1, %cst [0] : vector<4x16x16xf32> to vector<16x16xf32>
    %cst_3 = arith.constant dense<0.000000e+00> : vector<16x16xf32>
    %3 = vector.multi_reduction <add>, %1, %cst_3 [0] : vector<4x16x16xf32> to vector<16x16xf32>
    %cst_4 = arith.constant 2.500000e-01 : f32
    %4 = vector.broadcast %cst_4 : f32 to vector<16x16xf32>
    %5 = arith.mulf %3, %4 : vector<16x16xf32>
    %cst_5 = arith.constant 0.000000e+00 : f32
    %6 = vector.broadcast %cst_5 : f32 to vector<2x22x22xf32>
    %c0_6 = arith.constant 0 : index
    %c0_7 = arith.constant 0 : index
    %c0_8 = arith.constant 0 : index
    %7 = vector.load %arg5[%c0_6, %c0_7, %c0_8] : memref<2x22x22xf32, #tpu.memory_space<vmem>>, vector<2x22x22xf32>
    tpu.vector_store %arg5[%c0_6, %c0_7, %c0_8], %6 {strides = array<i32>} : memref<2x22x22xf32, #tpu.memory_space<vmem>>, vector<2x22x22xf32>,
    %c0_9 = arith.constant 0 : index
    %c3 = arith.constant 3 : index
    %c3_10 = arith.constant 3 : index
    %8 = vector.load %arg5[%c0_9, %c3, %c3_10] : memref<2x22x22xf32, #tpu.memory_space<vmem>>, vector<1x16x16xf32>
    %9 = vector.shape_cast %8 : vector<1x16x16xf32> to vector<16x16xf32>
    %10 = vector.shape_cast %2 : vector<16x16xf32> to vector<1x16x16xf32>
    tpu.vector_store %arg5[%c0_9, %c3, %c3_10], %10 {strides = array<i32>} : memref<2x22x22xf32, #tpu.memory_space<vmem>>, vector<1x16x16xf32>,
    %c1 = arith.constant 1 : index
    %c3_11 = arith.constant 3 : index
    %c3_12 = arith.constant 3 : index
    %11 = vector.load %arg5[%c1, %c3_11, %c3_12] : memref<2x22x22xf32, #tpu.memory_space<vmem>>, vector<1x16x16xf32>
    %12 = vector.shape_cast %11 : vector<1x16x16xf32> to vector<16x16xf32>
    %13 = vector.shape_cast %5 : vector<16x16xf32> to vector<1x16x16xf32>
    tpu.vector_store %arg5[%c1, %c3_11, %c3_12], %13 {strides = array<i32>} : memref<2x22x22xf32, #tpu.memory_space<vmem>>, vector<1x16x16xf32>,
    %c0_13 = arith.constant 0 : index
    %14 = memref.load %arg3[%c0_13] : memref<1xf32, #tpu.memory_space<smem>>
    %cst_14 = arith.constant 0.000000e+00 : f32
    %15 = vector.broadcast %cst_14 : f32 to vector<16x16xf32>
    %c0_15 = arith.constant 0 : index
    %16 = memref.load %arg2[%c0_15] : memref<98xf32, #tpu.memory_space<smem>>
    %c0_16 = arith.constant 0 : index
    %c0_17 = arith.constant 0 : index
    %c0_18 = arith.constant 0 : index
    %17 = vector.load %arg5[%c0_16, %c0_17, %c0_18] : memref<2x22x22xf32, #tpu.memory_space<vmem>>, vector<1x16x16xf32>
    %18 = vector.shape_cast %17 : vector<1x16x16xf32> to vector<16x16xf32>
    %19 = vector.broadcast %16 : f32 to vector<16x16xf32>
    %20 = arith.mulf %18, %19 : vector<16x16xf32>
    %21 = arith.addf %15, %20 : vector<16x16xf32>
    %c1_19 = arith.constant 1 : index
    %22 = memref.load %arg2[%c1_19] : memref<98xf32, #tpu.memory_space<smem>>
    %c0_20 = arith.constant 0 : index
    %c0_21 = arith.constant 0 : index
    %c1_22 = arith.constant 1 : index
    %23 = vector.load %arg5[%c0_20, %c0_21, %c1_22] : memref<2x22x22xf32, #tpu.memory_space<vmem>>, vector<1x16x16xf32>
    %24 = vector.shape_cast %23 : vector<1x16x16xf32> to vector<16x16xf32>
    %25 = vector.broadcast %22 : f32 to vector<16x16xf32>
    %26 = arith.mulf %24, %25 : vector<16x16xf32>
    %27 = arith.addf %21, %26 : vector<16x16xf32>
    %c2 = arith.constant 2 : index
    %28 = memref.load %arg2[%c2] : memref<98xf32, #tpu.memory_space<smem>>
    %c0_23 = arith.constant 0 : index
    %c0_24 = arith.constant 0 : index
    %c2_25 = arith.constant 2 : index
    %29 = vector.load %arg5[%c0_23, %c0_24, %c2_25] : memref<2x22x22xf32, #tpu.memory_space<vmem>>, vector<1x16x16xf32>
    %30 = vector.shape_cast %29 : vector<1x16x16xf32> to vector<16x16xf32>
    %31 = vector.broadcast %28 : f32 to vector<16x16xf32>
    %32 = arith.mulf %30, %31 : vector<16x16xf32>
    %33 = arith.addf %27, %32 : vector<16x16xf32>
    %c3_26 = arith.constant 3 : index
    %34 = memref.load %arg2[%c3_26] : memref<98xf32, #tpu.memory_space<smem>>
    %c0_27 = arith.constant 0 : index
    %c0_28 = arith.constant 0 : index
    %c3_29 = arith.constant 3 : index
    %35 = vector.load %arg5[%c0_27, %c0_28, %c3_29] : memref<2x22x22xf32, #tpu.memory_space<vmem>>, vector<1x16x16xf32>
    %36 = vector.shape_cast %35 : vector<1x16x16xf32> to vector<16x16xf32>
    %37 = vector.broadcast %34 : f32 to vector<16x16xf32>
    %38 = arith.mulf %36, %37 : vector<16x16xf32>
    %39 = arith.addf %33, %38 : vector<16x16xf32>
    %c4 = arith.constant 4 : index
    %40 = memref.load %arg2[%c4] : memref<98xf32, #tpu.memory_space<smem>>
    %c0_30 = arith.constant 0 : index
    %c0_31 = arith.constant 0 : index
    %c4_32 = arith.constant 4 : index
    %41 = vector.load %arg5[%c0_30, %c0_31, %c4_32] : memref<2x22x22xf32, #tpu.memory_space<vmem>>, vector<1x16x16xf32>
    %42 = vector.shape_cast %41 : vector<1x16x16xf32> to vector<16x16xf32>
    %43 = vector.broadcast %40 : f32 to vector<16x16xf32>
    %44 = arith.mulf %42, %43 : vector<16x16xf32>
    %45 = arith.addf %39, %44 : vector<16x16xf32>
    %c5 = arith.constant 5 : index
    %46 = memref.load %arg2[%c5] : memref<98xf32, #tpu.memory_space<smem>>
    %c0_33 = arith.constant 0 : index
    %c0_34 = arith.constant 0 : index
    %c5_35 = arith.constant 5 : index
    %47 = vector.load %arg5[%c0_33, %c0_34, %c5_35] : memref<2x22x22xf32, #tpu.memory_space<vmem>>, vector<1x16x16xf32>
    %48 = vector.shape_cast %47 : vector<1x16x16xf32> to vector<16x16xf32>
    %49 = vector.broadcast %46 : f32 to vector<16x16xf32>
    %50 = arith.mulf %48, %49 : vector<16x16xf32>
    %51 = arith.addf %45, %50 : vector<16x16xf32>
    %c6 = arith.constant 6 : index
    %52 = memref.load %arg2[%c6] : memref<98xf32, #tpu.memory_space<smem>>
    %c0_36 = arith.constant 0 : index
    %c0_37 = arith.constant 0 : index
    %c6_38 = arith.constant 6 : index
    %53 = vector.load %arg5[%c0_36, %c0_37, %c6_38] : memref<2x22x22xf32, #tpu.memory_space<vmem>>, vector<1x16x16xf32>
    %54 = vector.shape_cast %53 : vector<1x16x16xf32> to vector<16x16xf32>
    %55 = vector.broadcast %52 : f32 to vector<16x16xf32>
    %56 = arith.mulf %54, %55 : vector<16x16xf32>
    %57 = arith.addf %51, %56 : vector<16x16xf32>
    %c7 = arith.constant 7 : index
    %58 = memref.load %arg2[%c7] : memref<98xf32, #tpu.memory_space<smem>>
    %c0_39 = arith.constant 0 : index
    %c1_40 = arith.constant 1 : index
    %c0_41 = arith.constant 0 : index
    %59 = vector.load %arg5[%c0_39, %c1_40, %c0_41] : memref<2x22x22xf32, #tpu.memory_space<vmem>>, vector<1x16x16xf32>
    %60 = vector.shape_cast %59 : vector<1x16x16xf32> to vector<16x16xf32>
    %61 = vector.broadcast %58 : f32 to vector<16x16xf32>
    %62 = arith.mulf %60, %61 : vector<16x16xf32>
    %63 = arith.addf %57, %62 : vector<16x16xf32>
    %c8 = arith.constant 8 : index
    %64 = memref.load %arg2[%c8] : memref<98xf32, #tpu.memory_space<smem>>
    %c0_42 = arith.constant 0 : index
    %c1_43 = arith.constant 1 : index
    %c1_44 = arith.constant 1 : index
    %65 = vector.load %arg5[%c0_42, %c1_43, %c1_44] : memref<2x22x22xf32, #tpu.memory_space<vmem>>, vector<1x16x16xf32>
    %66 = vector.shape_cast %65 : vector<1x16x16xf32> to vector<16x16xf32>
    %67 = vector.broadcast %64 : f32 to vector<16x16xf32>
    %68 = arith.mulf %66, %67 : vector<16x16xf32>
    %69 = arith.addf %63, %68 : vector<16x16xf32>
    %c9 = arith.constant 9 : index
    %70 = memref.load %arg2[%c9] : memref<98xf32, #tpu.memory_space<smem>>
    %c0_45 = arith.constant 0 : index
    %c1_46 = arith.constant 1 : index
    %c2_47 = arith.constant 2 : index
    %71 = vector.load %arg5[%c0_45, %c1_46, %c2_47] : memref<2x22x22xf32, #tpu.memory_space<vmem>>, vector<1x16x16xf32>
    %72 = vector.shape_cast %71 : vector<1x16x16xf32> to vector<16x16xf32>
    %73 = vector.broadcast %70 : f32 to vector<16x16xf32>
    %74 = arith.mulf %72, %73 : vector<16x16xf32>
    %75 = arith.addf %69, %74 : vector<16x16xf32>
    %c10 = arith.constant 10 : index
    %76 = memref.load %arg2[%c10] : memref<98xf32, #tpu.memory_space<smem>>
    %c0_48 = arith.constant 0 : index
    %c1_49 = arith.constant 1 : index
    %c3_50 = arith.constant 3 : index
    %77 = vector.load %arg5[%c0_48, %c1_49, %c3_50] : memref<2x22x22xf32, #tpu.memory_space<vmem>>, vector<1x16x16xf32>
    %78 = vector.shape_cast %77 : vector<1x16x16xf32> to vector<16x16xf32>
    %79 = vector.broadcast %76 : f32 to vector<16x16xf32>
    %80 = arith.mulf %78, %79 : vector<16x16xf32>
    %81 = arith.addf %75, %80 : vector<16x16xf32>
    %c11 = arith.constant 11 : index
    %82 = memref.load %arg2[%c11] : memref<98xf32, #tpu.memory_space<smem>>
    %c0_51 = arith.constant 0 : index
    %c1_52 = arith.constant 1 : index
    %c4_53 = arith.constant 4 : index
    %83 = vector.load %arg5[%c0_51, %c1_52, %c4_53] : memref<2x22x22xf32, #tpu.memory_space<vmem>>, vector<1x16x16xf32>
    %84 = vector.shape_cast %83 : vector<1x16x16xf32> to vector<16x16xf32>
    %85 = vector.broadcast %82 : f32 to vector<16x16xf32>
    %86 = arith.mulf %84, %85 : vector<16x16xf32>
    %87 = arith.addf %81, %86 : vector<16x16xf32>
    %c12 = arith.constant 12 : index
    %88 = memref.load %arg2[%c12] : memref<98xf32, #tpu.memory_space<smem>>
    %c0_54 = arith.constant 0 : index
    %c1_55 = arith.constant 1 : index
    %c5_56 = arith.constant 5 : index
    %89 = vector.load %arg5[%c0_54, %c1_55, %c5_56] : memref<2x22x22xf32, #tpu.memory_space<vmem>>, vector<1x16x16xf32>
    %90 = vector.shape_cast %89 : vector<1x16x16xf32> to vector<16x16xf32>
    %91 = vector.broadcast %88 : f32 to vector<16x16xf32>
    %92 = arith.mulf %90, %91 : vector<16x16xf32>
    %93 = arith.addf %87, %92 : vector<16x16xf32>
    %c13 = arith.constant 13 : index
    %94 = memref.load %arg2[%c13] : memref<98xf32, #tpu.memory_space<smem>>
    %c0_57 = arith.constant 0 : index
    %c1_58 = arith.constant 1 : index
    %c6_59 = arith.constant 6 : index
    %95 = vector.load %arg5[%c0_57, %c1_58, %c6_59] : memref<2x22x22xf32, #tpu.memory_space<vmem>>, vector<1x16x16xf32>
    %96 = vector.shape_cast %95 : vector<1x16x16xf32> to vector<16x16xf32>
    %97 = vector.broadcast %94 : f32 to vector<16x16xf32>
    %98 = arith.mulf %96, %97 : vector<16x16xf32>
    %99 = arith.addf %93, %98 : vector<16x16xf32>
    %c14 = arith.constant 14 : index
    %100 = memref.load %arg2[%c14] : memref<98xf32, #tpu.memory_space<smem>>
    %c0_60 = arith.constant 0 : index
    %c2_61 = arith.constant 2 : index
    %c0_62 = arith.constant 0 : index
    %101 = vector.load %arg5[%c0_60, %c2_61, %c0_62] : memref<2x22x22xf32, #tpu.memory_space<vmem>>, vector<1x16x16xf32>
    %102 = vector.shape_cast %101 : vector<1x16x16xf32> to vector<16x16xf32>
    %103 = vector.broadcast %100 : f32 to vector<16x16xf32>
    %104 = arith.mulf %102, %103 : vector<16x16xf32>
    %105 = arith.addf %99, %104 : vector<16x16xf32>
    %c15 = arith.constant 15 : index
    %106 = memref.load %arg2[%c15] : memref<98xf32, #tpu.memory_space<smem>>
    %c0_63 = arith.constant 0 : index
    %c2_64 = arith.constant 2 : index
    %c1_65 = arith.constant 1 : index
    %107 = vector.load %arg5[%c0_63, %c2_64, %c1_65] : memref<2x22x22xf32, #tpu.memory_space<vmem>>, vector<1x16x16xf32>
    %108 = vector.shape_cast %107 : vector<1x16x16xf32> to vector<16x16xf32>
    %109 = vector.broadcast %106 : f32 to vector<16x16xf32>
    %110 = arith.mulf %108, %109 : vector<16x16xf32>
    %111 = arith.addf %105, %110 : vector<16x16xf32>
    %c16 = arith.constant 16 : index
    %112 = memref.load %arg2[%c16] : memref<98xf32, #tpu.memory_space<smem>>
    %c0_66 = arith.constant 0 : index
    %c2_67 = arith.constant 2 : index
    %c2_68 = arith.constant 2 : index
    %113 = vector.load %arg5[%c0_66, %c2_67, %c2_68] : memref<2x22x22xf32, #tpu.memory_space<vmem>>, vector<1x16x16xf32>
    %114 = vector.shape_cast %113 : vector<1x16x16xf32> to vector<16x16xf32>
    %115 = vector.broadcast %112 : f32 to vector<16x16xf32>
    %116 = arith.mulf %114, %115 : vector<16x16xf32>
    %117 = arith.addf %111, %116 : vector<16x16xf32>
    %c17 = arith.constant 17 : index
    %118 = memref.load %arg2[%c17] : memref<98xf32, #tpu.memory_space<smem>>
    %c0_69 = arith.constant 0 : index
    %c2_70 = arith.constant 2 : index
    %c3_71 = arith.constant 3 : index
    %119 = vector.load %arg5[%c0_69, %c2_70, %c3_71] : memref<2x22x22xf32, #tpu.memory_space<vmem>>, vector<1x16x16xf32>
    %120 = vector.shape_cast %119 : vector<1x16x16xf32> to vector<16x16xf32>
    %121 = vector.broadcast %118 : f32 to vector<16x16xf32>
    %122 = arith.mulf %120, %121 : vector<16x16xf32>
    %123 = arith.addf %117, %122 : vector<16x16xf32>
    %c18 = arith.constant 18 : index
    %124 = memref.load %arg2[%c18] : memref<98xf32, #tpu.memory_space<smem>>
    %c0_72 = arith.constant 0 : index
    %c2_73 = arith.constant 2 : index
    %c4_74 = arith.constant 4 : index
    %125 = vector.load %arg5[%c0_72, %c2_73, %c4_74] : memref<2x22x22xf32, #tpu.memory_space<vmem>>, vector<1x16x16xf32>
    %126 = vector.shape_cast %125 : vector<1x16x16xf32> to vector<16x16xf32>
    %127 = vector.broadcast %124 : f32 to vector<16x16xf32>
    %128 = arith.mulf %126, %127 : vector<16x16xf32>
    %129 = arith.addf %123, %128 : vector<16x16xf32>
    %c19 = arith.constant 19 : index
    %130 = memref.load %arg2[%c19] : memref<98xf32, #tpu.memory_space<smem>>
    %c0_75 = arith.constant 0 : index
    %c2_76 = arith.constant 2 : index
    %c5_77 = arith.constant 5 : index
    %131 = vector.load %arg5[%c0_75, %c2_76, %c5_77] : memref<2x22x22xf32, #tpu.memory_space<vmem>>, vector<1x16x16xf32>
    %132 = vector.shape_cast %131 : vector<1x16x16xf32> to vector<16x16xf32>
    %133 = vector.broadcast %130 : f32 to vector<16x16xf32>
    %134 = arith.mulf %132, %133 : vector<16x16xf32>
    %135 = arith.addf %129, %134 : vector<16x16xf32>
    %c20 = arith.constant 20 : index
    %136 = memref.load %arg2[%c20] : memref<98xf32, #tpu.memory_space<smem>>
    %c0_78 = arith.constant 0 : index
    %c2_79 = arith.constant 2 : index
    %c6_80 = arith.constant 6 : index
    %137 = vector.load %arg5[%c0_78, %c2_79, %c6_80] : memref<2x22x22xf32, #tpu.memory_space<vmem>>, vector<1x16x16xf32>
    %138 = vector.shape_cast %137 : vector<1x16x16xf32> to vector<16x16xf32>
    %139 = vector.broadcast %136 : f32 to vector<16x16xf32>
    %140 = arith.mulf %138, %139 : vector<16x16xf32>
    %141 = arith.addf %135, %140 : vector<16x16xf32>
    %c21 = arith.constant 21 : index
    %142 = memref.load %arg2[%c21] : memref<98xf32, #tpu.memory_space<smem>>
    %c0_81 = arith.constant 0 : index
    %c3_82 = arith.constant 3 : index
    %c0_83 = arith.constant 0 : index
    %143 = vector.load %arg5[%c0_81, %c3_82, %c0_83] : memref<2x22x22xf32, #tpu.memory_space<vmem>>, vector<1x16x16xf32>
    %144 = vector.shape_cast %143 : vector<1x16x16xf32> to vector<16x16xf32>
    %145 = vector.broadcast %142 : f32 to vector<16x16xf32>
    %146 = arith.mulf %144, %145 : vector<16x16xf32>
    %147 = arith.addf %141, %146 : vector<16x16xf32>
    %c22 = arith.constant 22 : index
    %148 = memref.load %arg2[%c22] : memref<98xf32, #tpu.memory_space<smem>>
    %c0_84 = arith.constant 0 : index
    %c3_85 = arith.constant 3 : index
    %c1_86 = arith.constant 1 : index
    %149 = vector.load %arg5[%c0_84, %c3_85, %c1_86] : memref<2x22x22xf32, #tpu.memory_space<vmem>>, vector<1x16x16xf32>
    %150 = vector.shape_cast %149 : vector<1x16x16xf32> to vector<16x16xf32>
    %151 = vector.broadcast %148 : f32 to vector<16x16xf32>
    %152 = arith.mulf %150, %151 : vector<16x16xf32>
    %153 = arith.addf %147, %152 : vector<16x16xf32>
    %c23 = arith.constant 23 : index
    %154 = memref.load %arg2[%c23] : memref<98xf32, #tpu.memory_space<smem>>
    %c0_87 = arith.constant 0 : index
    %c3_88 = arith.constant 3 : index
    %c2_89 = arith.constant 2 : index
    %155 = vector.load %arg5[%c0_87, %c3_88, %c2_89] : memref<2x22x22xf32, #tpu.memory_space<vmem>>, vector<1x16x16xf32>
    %156 = vector.shape_cast %155 : vector<1x16x16xf32> to vector<16x16xf32>
    %157 = vector.broadcast %154 : f32 to vector<16x16xf32>
    %158 = arith.mulf %156, %157 : vector<16x16xf32>
    %159 = arith.addf %153, %158 : vector<16x16xf32>
    %c24 = arith.constant 24 : index
    %160 = memref.load %arg2[%c24] : memref<98xf32, #tpu.memory_space<smem>>
    %c0_90 = arith.constant 0 : index
    %c3_91 = arith.constant 3 : index
    %c3_92 = arith.constant 3 : index
    %161 = vector.load %arg5[%c0_90, %c3_91, %c3_92] : memref<2x22x22xf32, #tpu.memory_space<vmem>>, vector<1x16x16xf32>
    %162 = vector.shape_cast %161 : vector<1x16x16xf32> to vector<16x16xf32>
    %163 = vector.broadcast %160 : f32 to vector<16x16xf32>
    %164 = arith.mulf %162, %163 : vector<16x16xf32>
    %165 = arith.addf %159, %164 : vector<16x16xf32>
    %c25 = arith.constant 25 : index
    %166 = memref.load %arg2[%c25] : memref<98xf32, #tpu.memory_space<smem>>
    %c0_93 = arith.constant 0 : index
    %c3_94 = arith.constant 3 : index
    %c4_95 = arith.constant 4 : index
    %167 = vector.load %arg5[%c0_93, %c3_94, %c4_95] : memref<2x22x22xf32, #tpu.memory_space<vmem>>, vector<1x16x16xf32>
    %168 = vector.shape_cast %167 : vector<1x16x16xf32> to vector<16x16xf32>
    %169 = vector.broadcast %166 : f32 to vector<16x16xf32>
    %170 = arith.mulf %168, %169 : vector<16x16xf32>
    %171 = arith.addf %165, %170 : vector<16x16xf32>
    %c26 = arith.constant 26 : index
    %172 = memref.load %arg2[%c26] : memref<98xf32, #tpu.memory_space<smem>>
    %c0_96 = arith.constant 0 : index
    %c3_97 = arith.constant 3 : index
    %c5_98 = arith.constant 5 : index
    %173 = vector.load %arg5[%c0_96, %c3_97, %c5_98] : memref<2x22x22xf32, #tpu.memory_space<vmem>>, vector<1x16x16xf32>
    %174 = vector.shape_cast %173 : vector<1x16x16xf32> to vector<16x16xf32>
    %175 = vector.broadcast %172 : f32 to vector<16x16xf32>
    %176 = arith.mulf %174, %175 : vector<16x16xf32>
    %177 = arith.addf %171, %176 : vector<16x16xf32>
    %c27 = arith.constant 27 : index
    %178 = memref.load %arg2[%c27] : memref<98xf32, #tpu.memory_space<smem>>
    %c0_99 = arith.constant 0 : index
    %c3_100 = arith.constant 3 : index
    %c6_101 = arith.constant 6 : index
    %179 = vector.load %arg5[%c0_99, %c3_100, %c6_101] : memref<2x22x22xf32, #tpu.memory_space<vmem>>, vector<1x16x16xf32>
    %180 = vector.shape_cast %179 : vector<1x16x16xf32> to vector<16x16xf32>
    %181 = vector.broadcast %178 : f32 to vector<16x16xf32>
    %182 = arith.mulf %180, %181 : vector<16x16xf32>
    %183 = arith.addf %177, %182 : vector<16x16xf32>
    %cst_102 = arith.constant 0.000000e+00 : f32
    %184 = vector.broadcast %cst_102 : f32 to vector<16x16xf32>
    %c28 = arith.constant 28 : index
    %185 = memref.load %arg2[%c28] : memref<98xf32, #tpu.memory_space<smem>>
    %c0_103 = arith.constant 0 : index
    %c4_104 = arith.constant 4 : index
    %c0_105 = arith.constant 0 : index
    %186 = vector.load %arg5[%c0_103, %c4_104, %c0_105] : memref<2x22x22xf32, #tpu.memory_space<vmem>>, vector<1x16x16xf32>
    %187 = vector.shape_cast %186 : vector<1x16x16xf32> to vector<16x16xf32>
    %188 = vector.broadcast %185 : f32 to vector<16x16xf32>
    %189 = arith.mulf %187, %188 : vector<16x16xf32>
    %190 = arith.addf %184, %189 : vector<16x16xf32>
    %c29 = arith.constant 29 : index
    %191 = memref.load %arg2[%c29] : memref<98xf32, #tpu.memory_space<smem>>
    %c0_106 = arith.constant 0 : index
    %c4_107 = arith.constant 4 : index
    %c1_108 = arith.constant 1 : index
    %192 = vector.load %arg5[%c0_106, %c4_107, %c1_108] : memref<2x22x22xf32, #tpu.memory_space<vmem>>, vector<1x16x16xf32>
    %193 = vector.shape_cast %192 : vector<1x16x16xf32> to vector<16x16xf32>
    %194 = vector.broadcast %191 : f32 to vector<16x16xf32>
    %195 = arith.mulf %193, %194 : vector<16x16xf32>
    %196 = arith.addf %190, %195 : vector<16x16xf32>
    %c30 = arith.constant 30 : index
    %197 = memref.load %arg2[%c30] : memref<98xf32, #tpu.memory_space<smem>>
    %c0_109 = arith.constant 0 : index
    %c4_110 = arith.constant 4 : index
    %c2_111 = arith.constant 2 : index
    %198 = vector.load %arg5[%c0_109, %c4_110, %c2_111] : memref<2x22x22xf32, #tpu.memory_space<vmem>>, vector<1x16x16xf32>
    %199 = vector.shape_cast %198 : vector<1x16x16xf32> to vector<16x16xf32>
    %200 = vector.broadcast %197 : f32 to vector<16x16xf32>
    %201 = arith.mulf %199, %200 : vector<16x16xf32>
    %202 = arith.addf %196, %201 : vector<16x16xf32>
    %c31 = arith.constant 31 : index
    %203 = memref.load %arg2[%c31] : memref<98xf32, #tpu.memory_space<smem>>
    %c0_112 = arith.constant 0 : index
    %c4_113 = arith.constant 4 : index
    %c3_114 = arith.constant 3 : index
    %204 = vector.load %arg5[%c0_112, %c4_113, %c3_114] : memref<2x22x22xf32, #tpu.memory_space<vmem>>, vector<1x16x16xf32>
    %205 = vector.shape_cast %204 : vector<1x16x16xf32> to vector<16x16xf32>
    %206 = vector.broadcast %203 : f32 to vector<16x16xf32>
    %207 = arith.mulf %205, %206 : vector<16x16xf32>
    %208 = arith.addf %202, %207 : vector<16x16xf32>
    %c32 = arith.constant 32 : index
    %209 = memref.load %arg2[%c32] : memref<98xf32, #tpu.memory_space<smem>>
    %c0_115 = arith.constant 0 : index
    %c4_116 = arith.constant 4 : index
    %c4_117 = arith.constant 4 : index
    %210 = vector.load %arg5[%c0_115, %c4_116, %c4_117] : memref<2x22x22xf32, #tpu.memory_space<vmem>>, vector<1x16x16xf32>
    %211 = vector.shape_cast %210 : vector<1x16x16xf32> to vector<16x16xf32>
    %212 = vector.broadcast %209 : f32 to vector<16x16xf32>
    %213 = arith.mulf %211, %212 : vector<16x16xf32>
    %214 = arith.addf %208, %213 : vector<16x16xf32>
    %c33 = arith.constant 33 : index
    %215 = memref.load %arg2[%c33] : memref<98xf32, #tpu.memory_space<smem>>
    %c0_118 = arith.constant 0 : index
    %c4_119 = arith.constant 4 : index
    %c5_120 = arith.constant 5 : index
    %216 = vector.load %arg5[%c0_118, %c4_119, %c5_120] : memref<2x22x22xf32, #tpu.memory_space<vmem>>, vector<1x16x16xf32>
    %217 = vector.shape_cast %216 : vector<1x16x16xf32> to vector<16x16xf32>
    %218 = vector.broadcast %215 : f32 to vector<16x16xf32>
    %219 = arith.mulf %217, %218 : vector<16x16xf32>
    %220 = arith.addf %214, %219 : vector<16x16xf32>
    %c34 = arith.constant 34 : index
    %221 = memref.load %arg2[%c34] : memref<98xf32, #tpu.memory_space<smem>>
    %c0_121 = arith.constant 0 : index
    %c4_122 = arith.constant 4 : index
    %c6_123 = arith.constant 6 : index
    %222 = vector.load %arg5[%c0_121, %c4_122, %c6_123] : memref<2x22x22xf32, #tpu.memory_space<vmem>>, vector<1x16x16xf32>
    %223 = vector.shape_cast %222 : vector<1x16x16xf32> to vector<16x16xf32>
    %224 = vector.broadcast %221 : f32 to vector<16x16xf32>
    %225 = arith.mulf %223, %224 : vector<16x16xf32>
    %226 = arith.addf %220, %225 : vector<16x16xf32>
    %c35 = arith.constant 35 : index
    %227 = memref.load %arg2[%c35] : memref<98xf32, #tpu.memory_space<smem>>
    %c0_124 = arith.constant 0 : index
    %c5_125 = arith.constant 5 : index
    %c0_126 = arith.constant 0 : index
    %228 = vector.load %arg5[%c0_124, %c5_125, %c0_126] : memref<2x22x22xf32, #tpu.memory_space<vmem>>, vector<1x16x16xf32>
    %229 = vector.shape_cast %228 : vector<1x16x16xf32> to vector<16x16xf32>
    %230 = vector.broadcast %227 : f32 to vector<16x16xf32>
    %231 = arith.mulf %229, %230 : vector<16x16xf32>
    %232 = arith.addf %226, %231 : vector<16x16xf32>
    %c36 = arith.constant 36 : index
    %233 = memref.load %arg2[%c36] : memref<98xf32, #tpu.memory_space<smem>>
    %c0_127 = arith.constant 0 : index
    %c5_128 = arith.constant 5 : index
    %c1_129 = arith.constant 1 : index
    %234 = vector.load %arg5[%c0_127, %c5_128, %c1_129] : memref<2x22x22xf32, #tpu.memory_space<vmem>>, vector<1x16x16xf32>
    %235 = vector.shape_cast %234 : vector<1x16x16xf32> to vector<16x16xf32>
    %236 = vector.broadcast %233 : f32 to vector<16x16xf32>
    %237 = arith.mulf %235, %236 : vector<16x16xf32>
    %238 = arith.addf %232, %237 : vector<16x16xf32>
    %c37 = arith.constant 37 : index
    %239 = memref.load %arg2[%c37] : memref<98xf32, #tpu.memory_space<smem>>
    %c0_130 = arith.constant 0 : index
    %c5_131 = arith.constant 5 : index
    %c2_132 = arith.constant 2 : index
    %240 = vector.load %arg5[%c0_130, %c5_131, %c2_132] : memref<2x22x22xf32, #tpu.memory_space<vmem>>, vector<1x16x16xf32>
    %241 = vector.shape_cast %240 : vector<1x16x16xf32> to vector<16x16xf32>
    %242 = vector.broadcast %239 : f32 to vector<16x16xf32>
    %243 = arith.mulf %241, %242 : vector<16x16xf32>
    %244 = arith.addf %238, %243 : vector<16x16xf32>
    %c38 = arith.constant 38 : index
    %245 = memref.load %arg2[%c38] : memref<98xf32, #tpu.memory_space<smem>>
    %c0_133 = arith.constant 0 : index
    %c5_134 = arith.constant 5 : index
    %c3_135 = arith.constant 3 : index
    %246 = vector.load %arg5[%c0_133, %c5_134, %c3_135] : memref<2x22x22xf32, #tpu.memory_space<vmem>>, vector<1x16x16xf32>
    %247 = vector.shape_cast %246 : vector<1x16x16xf32> to vector<16x16xf32>
    %248 = vector.broadcast %245 : f32 to vector<16x16xf32>
    %249 = arith.mulf %247, %248 : vector<16x16xf32>
    %250 = arith.addf %244, %249 : vector<16x16xf32>
    %c39 = arith.constant 39 : index
    %251 = memref.load %arg2[%c39] : memref<98xf32, #tpu.memory_space<smem>>
    %c0_136 = arith.constant 0 : index
    %c5_137 = arith.constant 5 : index
    %c4_138 = arith.constant 4 : index
    %252 = vector.load %arg5[%c0_136, %c5_137, %c4_138] : memref<2x22x22xf32, #tpu.memory_space<vmem>>, vector<1x16x16xf32>
    %253 = vector.shape_cast %252 : vector<1x16x16xf32> to vector<16x16xf32>
    %254 = vector.broadcast %251 : f32 to vector<16x16xf32>
    %255 = arith.mulf %253, %254 : vector<16x16xf32>
    %256 = arith.addf %250, %255 : vector<16x16xf32>
    %c40 = arith.constant 40 : index
    %257 = memref.load %arg2[%c40] : memref<98xf32, #tpu.memory_space<smem>>
    %c0_139 = arith.constant 0 : index
    %c5_140 = arith.constant 5 : index
    %c5_141 = arith.constant 5 : index
    %258 = vector.load %arg5[%c0_139, %c5_140, %c5_141] : memref<2x22x22xf32, #tpu.memory_space<vmem>>, vector<1x16x16xf32>
    %259 = vector.shape_cast %258 : vector<1x16x16xf32> to vector<16x16xf32>
    %260 = vector.broadcast %257 : f32 to vector<16x16xf32>
    %261 = arith.mulf %259, %260 : vector<16x16xf32>
    %262 = arith.addf %256, %261 : vector<16x16xf32>
    %c41 = arith.constant 41 : index
    %263 = memref.load %arg2[%c41] : memref<98xf32, #tpu.memory_space<smem>>
    %c0_142 = arith.constant 0 : index
    %c5_143 = arith.constant 5 : index
    %c6_144 = arith.constant 6 : index
    %264 = vector.load %arg5[%c0_142, %c5_143, %c6_144] : memref<2x22x22xf32, #tpu.memory_space<vmem>>, vector<1x16x16xf32>
    %265 = vector.shape_cast %264 : vector<1x16x16xf32> to vector<16x16xf32>
    %266 = vector.broadcast %263 : f32 to vector<16x16xf32>
    %267 = arith.mulf %265, %266 : vector<16x16xf32>
    %268 = arith.addf %262, %267 : vector<16x16xf32>
    %c42 = arith.constant 42 : index
    %269 = memref.load %arg2[%c42] : memref<98xf32, #tpu.memory_space<smem>>
    %c0_145 = arith.constant 0 : index
    %c6_146 = arith.constant 6 : index
    %c0_147 = arith.constant 0 : index
    %270 = vector.load %arg5[%c0_145, %c6_146, %c0_147] : memref<2x22x22xf32, #tpu.memory_space<vmem>>, vector<1x16x16xf32>
    %271 = vector.shape_cast %270 : vector<1x16x16xf32> to vector<16x16xf32>
    %272 = vector.broadcast %269 : f32 to vector<16x16xf32>
    %273 = arith.mulf %271, %272 : vector<16x16xf32>
    %274 = arith.addf %268, %273 : vector<16x16xf32>
    %c43 = arith.constant 43 : index
    %275 = memref.load %arg2[%c43] : memref<98xf32, #tpu.memory_space<smem>>
    %c0_148 = arith.constant 0 : index
    %c6_149 = arith.constant 6 : index
    %c1_150 = arith.constant 1 : index
    %276 = vector.load %arg5[%c0_148, %c6_149, %c1_150] : memref<2x22x22xf32, #tpu.memory_space<vmem>>, vector<1x16x16xf32>
    %277 = vector.shape_cast %276 : vector<1x16x16xf32> to vector<16x16xf32>
    %278 = vector.broadcast %275 : f32 to vector<16x16xf32>
    %279 = arith.mulf %277, %278 : vector<16x16xf32>
    %280 = arith.addf %274, %279 : vector<16x16xf32>
    %c44 = arith.constant 44 : index
    %281 = memref.load %arg2[%c44] : memref<98xf32, #tpu.memory_space<smem>>
    %c0_151 = arith.constant 0 : index
    %c6_152 = arith.constant 6 : index
    %c2_153 = arith.constant 2 : index
    %282 = vector.load %arg5[%c0_151, %c6_152, %c2_153] : memref<2x22x22xf32, #tpu.memory_space<vmem>>, vector<1x16x16xf32>
    %283 = vector.shape_cast %282 : vector<1x16x16xf32> to vector<16x16xf32>
    %284 = vector.broadcast %281 : f32 to vector<16x16xf32>
    %285 = arith.mulf %283, %284 : vector<16x16xf32>
    %286 = arith.addf %280, %285 : vector<16x16xf32>
    %c45 = arith.constant 45 : index
    %287 = memref.load %arg2[%c45] : memref<98xf32, #tpu.memory_space<smem>>
    %c0_154 = arith.constant 0 : index
    %c6_155 = arith.constant 6 : index
    %c3_156 = arith.constant 3 : index
    %288 = vector.load %arg5[%c0_154, %c6_155, %c3_156] : memref<2x22x22xf32, #tpu.memory_space<vmem>>, vector<1x16x16xf32>
    %289 = vector.shape_cast %288 : vector<1x16x16xf32> to vector<16x16xf32>
    %290 = vector.broadcast %287 : f32 to vector<16x16xf32>
    %291 = arith.mulf %289, %290 : vector<16x16xf32>
    %292 = arith.addf %286, %291 : vector<16x16xf32>
    %c46 = arith.constant 46 : index
    %293 = memref.load %arg2[%c46] : memref<98xf32, #tpu.memory_space<smem>>
    %c0_157 = arith.constant 0 : index
    %c6_158 = arith.constant 6 : index
    %c4_159 = arith.constant 4 : index
    %294 = vector.load %arg5[%c0_157, %c6_158, %c4_159] : memref<2x22x22xf32, #tpu.memory_space<vmem>>, vector<1x16x16xf32>
    %295 = vector.shape_cast %294 : vector<1x16x16xf32> to vector<16x16xf32>
    %296 = vector.broadcast %293 : f32 to vector<16x16xf32>
    %297 = arith.mulf %295, %296 : vector<16x16xf32>
    %298 = arith.addf %292, %297 : vector<16x16xf32>
    %c47 = arith.constant 47 : index
    %299 = memref.load %arg2[%c47] : memref<98xf32, #tpu.memory_space<smem>>
    %c0_160 = arith.constant 0 : index
    %c6_161 = arith.constant 6 : index
    %c5_162 = arith.constant 5 : index
    %300 = vector.load %arg5[%c0_160, %c6_161, %c5_162] : memref<2x22x22xf32, #tpu.memory_space<vmem>>, vector<1x16x16xf32>
    %301 = vector.shape_cast %300 : vector<1x16x16xf32> to vector<16x16xf32>
    %302 = vector.broadcast %299 : f32 to vector<16x16xf32>
    %303 = arith.mulf %301, %302 : vector<16x16xf32>
    %304 = arith.addf %298, %303 : vector<16x16xf32>
    %c48 = arith.constant 48 : index
    %305 = memref.load %arg2[%c48] : memref<98xf32, #tpu.memory_space<smem>>
    %c0_163 = arith.constant 0 : index
    %c6_164 = arith.constant 6 : index
    %c6_165 = arith.constant 6 : index
    %306 = vector.load %arg5[%c0_163, %c6_164, %c6_165] : memref<2x22x22xf32, #tpu.memory_space<vmem>>, vector<1x16x16xf32>
    %307 = vector.shape_cast %306 : vector<1x16x16xf32> to vector<16x16xf32>
    %308 = vector.broadcast %305 : f32 to vector<16x16xf32>
    %309 = arith.mulf %307, %308 : vector<16x16xf32>
    %310 = arith.addf %304, %309 : vector<16x16xf32>
    %cst_166 = arith.constant 0.000000e+00 : f32
    %311 = vector.broadcast %cst_166 : f32 to vector<16x16xf32>
    %c49 = arith.constant 49 : index
    %312 = memref.load %arg2[%c49] : memref<98xf32, #tpu.memory_space<smem>>
    %c1_167 = arith.constant 1 : index
    %c0_168 = arith.constant 0 : index
    %c0_169 = arith.constant 0 : index
    %313 = vector.load %arg5[%c1_167, %c0_168, %c0_169] : memref<2x22x22xf32, #tpu.memory_space<vmem>>, vector<1x16x16xf32>
    %314 = vector.shape_cast %313 : vector<1x16x16xf32> to vector<16x16xf32>
    %315 = vector.broadcast %312 : f32 to vector<16x16xf32>
    %316 = arith.mulf %314, %315 : vector<16x16xf32>
    %317 = arith.addf %311, %316 : vector<16x16xf32>
    %c50 = arith.constant 50 : index
    %318 = memref.load %arg2[%c50] : memref<98xf32, #tpu.memory_space<smem>>
    %c1_170 = arith.constant 1 : index
    %c0_171 = arith.constant 0 : index
    %c1_172 = arith.constant 1 : index
    %319 = vector.load %arg5[%c1_170, %c0_171, %c1_172] : memref<2x22x22xf32, #tpu.memory_space<vmem>>, vector<1x16x16xf32>
    %320 = vector.shape_cast %319 : vector<1x16x16xf32> to vector<16x16xf32>
    %321 = vector.broadcast %318 : f32 to vector<16x16xf32>
    %322 = arith.mulf %320, %321 : vector<16x16xf32>
    %323 = arith.addf %317, %322 : vector<16x16xf32>
    %c51 = arith.constant 51 : index
    %324 = memref.load %arg2[%c51] : memref<98xf32, #tpu.memory_space<smem>>
    %c1_173 = arith.constant 1 : index
    %c0_174 = arith.constant 0 : index
    %c2_175 = arith.constant 2 : index
    %325 = vector.load %arg5[%c1_173, %c0_174, %c2_175] : memref<2x22x22xf32, #tpu.memory_space<vmem>>, vector<1x16x16xf32>
    %326 = vector.shape_cast %325 : vector<1x16x16xf32> to vector<16x16xf32>
    %327 = vector.broadcast %324 : f32 to vector<16x16xf32>
    %328 = arith.mulf %326, %327 : vector<16x16xf32>
    %329 = arith.addf %323, %328 : vector<16x16xf32>
    %c52 = arith.constant 52 : index
    %330 = memref.load %arg2[%c52] : memref<98xf32, #tpu.memory_space<smem>>
    %c1_176 = arith.constant 1 : index
    %c0_177 = arith.constant 0 : index
    %c3_178 = arith.constant 3 : index
    %331 = vector.load %arg5[%c1_176, %c0_177, %c3_178] : memref<2x22x22xf32, #tpu.memory_space<vmem>>, vector<1x16x16xf32>
    %332 = vector.shape_cast %331 : vector<1x16x16xf32> to vector<16x16xf32>
    %333 = vector.broadcast %330 : f32 to vector<16x16xf32>
    %334 = arith.mulf %332, %333 : vector<16x16xf32>
    %335 = arith.addf %329, %334 : vector<16x16xf32>
    %c53 = arith.constant 53 : index
    %336 = memref.load %arg2[%c53] : memref<98xf32, #tpu.memory_space<smem>>
    %c1_179 = arith.constant 1 : index
    %c0_180 = arith.constant 0 : index
    %c4_181 = arith.constant 4 : index
    %337 = vector.load %arg5[%c1_179, %c0_180, %c4_181] : memref<2x22x22xf32, #tpu.memory_space<vmem>>, vector<1x16x16xf32>
    %338 = vector.shape_cast %337 : vector<1x16x16xf32> to vector<16x16xf32>
    %339 = vector.broadcast %336 : f32 to vector<16x16xf32>
    %340 = arith.mulf %338, %339 : vector<16x16xf32>
    %341 = arith.addf %335, %340 : vector<16x16xf32>
    %c54 = arith.constant 54 : index
    %342 = memref.load %arg2[%c54] : memref<98xf32, #tpu.memory_space<smem>>
    %c1_182 = arith.constant 1 : index
    %c0_183 = arith.constant 0 : index
    %c5_184 = arith.constant 5 : index
    %343 = vector.load %arg5[%c1_182, %c0_183, %c5_184] : memref<2x22x22xf32, #tpu.memory_space<vmem>>, vector<1x16x16xf32>
    %344 = vector.shape_cast %343 : vector<1x16x16xf32> to vector<16x16xf32>
    %345 = vector.broadcast %342 : f32 to vector<16x16xf32>
    %346 = arith.mulf %344, %345 : vector<16x16xf32>
    %347 = arith.addf %341, %346 : vector<16x16xf32>
    %c55 = arith.constant 55 : index
    %348 = memref.load %arg2[%c55] : memref<98xf32, #tpu.memory_space<smem>>
    %c1_185 = arith.constant 1 : index
    %c0_186 = arith.constant 0 : index
    %c6_187 = arith.constant 6 : index
    %349 = vector.load %arg5[%c1_185, %c0_186, %c6_187] : memref<2x22x22xf32, #tpu.memory_space<vmem>>, vector<1x16x16xf32>
    %350 = vector.shape_cast %349 : vector<1x16x16xf32> to vector<16x16xf32>
    %351 = vector.broadcast %348 : f32 to vector<16x16xf32>
    %352 = arith.mulf %350, %351 : vector<16x16xf32>
    %353 = arith.addf %347, %352 : vector<16x16xf32>
    %c56 = arith.constant 56 : index
    %354 = memref.load %arg2[%c56] : memref<98xf32, #tpu.memory_space<smem>>
    %c1_188 = arith.constant 1 : index
    %c1_189 = arith.constant 1 : index
    %c0_190 = arith.constant 0 : index
    %355 = vector.load %arg5[%c1_188, %c1_189, %c0_190] : memref<2x22x22xf32, #tpu.memory_space<vmem>>, vector<1x16x16xf32>
    %356 = vector.shape_cast %355 : vector<1x16x16xf32> to vector<16x16xf32>
    %357 = vector.broadcast %354 : f32 to vector<16x16xf32>
    %358 = arith.mulf %356, %357 : vector<16x16xf32>
    %359 = arith.addf %353, %358 : vector<16x16xf32>
    %c57 = arith.constant 57 : index
    %360 = memref.load %arg2[%c57] : memref<98xf32, #tpu.memory_space<smem>>
    %c1_191 = arith.constant 1 : index
    %c1_192 = arith.constant 1 : index
    %c1_193 = arith.constant 1 : index
    %361 = vector.load %arg5[%c1_191, %c1_192, %c1_193] : memref<2x22x22xf32, #tpu.memory_space<vmem>>, vector<1x16x16xf32>
    %362 = vector.shape_cast %361 : vector<1x16x16xf32> to vector<16x16xf32>
    %363 = vector.broadcast %360 : f32 to vector<16x16xf32>
    %364 = arith.mulf %362, %363 : vector<16x16xf32>
    %365 = arith.addf %359, %364 : vector<16x16xf32>
    %c58 = arith.constant 58 : index
    %366 = memref.load %arg2[%c58] : memref<98xf32, #tpu.memory_space<smem>>
    %c1_194 = arith.constant 1 : index
    %c1_195 = arith.constant 1 : index
    %c2_196 = arith.constant 2 : index
    %367 = vector.load %arg5[%c1_194, %c1_195, %c2_196] : memref<2x22x22xf32, #tpu.memory_space<vmem>>, vector<1x16x16xf32>
    %368 = vector.shape_cast %367 : vector<1x16x16xf32> to vector<16x16xf32>
    %369 = vector.broadcast %366 : f32 to vector<16x16xf32>
    %370 = arith.mulf %368, %369 : vector<16x16xf32>
    %371 = arith.addf %365, %370 : vector<16x16xf32>
    %c59 = arith.constant 59 : index
    %372 = memref.load %arg2[%c59] : memref<98xf32, #tpu.memory_space<smem>>
    %c1_197 = arith.constant 1 : index
    %c1_198 = arith.constant 1 : index
    %c3_199 = arith.constant 3 : index
    %373 = vector.load %arg5[%c1_197, %c1_198, %c3_199] : memref<2x22x22xf32, #tpu.memory_space<vmem>>, vector<1x16x16xf32>
    %374 = vector.shape_cast %373 : vector<1x16x16xf32> to vector<16x16xf32>
    %375 = vector.broadcast %372 : f32 to vector<16x16xf32>
    %376 = arith.mulf %374, %375 : vector<16x16xf32>
    %377 = arith.addf %371, %376 : vector<16x16xf32>
    %c60 = arith.constant 60 : index
    %378 = memref.load %arg2[%c60] : memref<98xf32, #tpu.memory_space<smem>>
    %c1_200 = arith.constant 1 : index
    %c1_201 = arith.constant 1 : index
    %c4_202 = arith.constant 4 : index
    %379 = vector.load %arg5[%c1_200, %c1_201, %c4_202] : memref<2x22x22xf32, #tpu.memory_space<vmem>>, vector<1x16x16xf32>
    %380 = vector.shape_cast %379 : vector<1x16x16xf32> to vector<16x16xf32>
    %381 = vector.broadcast %378 : f32 to vector<16x16xf32>
    %382 = arith.mulf %380, %381 : vector<16x16xf32>
    %383 = arith.addf %377, %382 : vector<16x16xf32>
    %c61 = arith.constant 61 : index
    %384 = memref.load %arg2[%c61] : memref<98xf32, #tpu.memory_space<smem>>
    %c1_203 = arith.constant 1 : index
    %c1_204 = arith.constant 1 : index
    %c5_205 = arith.constant 5 : index
    %385 = vector.load %arg5[%c1_203, %c1_204, %c5_205] : memref<2x22x22xf32, #tpu.memory_space<vmem>>, vector<1x16x16xf32>
    %386 = vector.shape_cast %385 : vector<1x16x16xf32> to vector<16x16xf32>
    %387 = vector.broadcast %384 : f32 to vector<16x16xf32>
    %388 = arith.mulf %386, %387 : vector<16x16xf32>
    %389 = arith.addf %383, %388 : vector<16x16xf32>
    %c62 = arith.constant 62 : index
    %390 = memref.load %arg2[%c62] : memref<98xf32, #tpu.memory_space<smem>>
    %c1_206 = arith.constant 1 : index
    %c1_207 = arith.constant 1 : index
    %c6_208 = arith.constant 6 : index
    %391 = vector.load %arg5[%c1_206, %c1_207, %c6_208] : memref<2x22x22xf32, #tpu.memory_space<vmem>>, vector<1x16x16xf32>
    %392 = vector.shape_cast %391 : vector<1x16x16xf32> to vector<16x16xf32>
    %393 = vector.broadcast %390 : f32 to vector<16x16xf32>
    %394 = arith.mulf %392, %393 : vector<16x16xf32>
    %395 = arith.addf %389, %394 : vector<16x16xf32>
    %c63 = arith.constant 63 : index
    %396 = memref.load %arg2[%c63] : memref<98xf32, #tpu.memory_space<smem>>
    %c1_209 = arith.constant 1 : index
    %c2_210 = arith.constant 2 : index
    %c0_211 = arith.constant 0 : index
    %397 = vector.load %arg5[%c1_209, %c2_210, %c0_211] : memref<2x22x22xf32, #tpu.memory_space<vmem>>, vector<1x16x16xf32>
    %398 = vector.shape_cast %397 : vector<1x16x16xf32> to vector<16x16xf32>
    %399 = vector.broadcast %396 : f32 to vector<16x16xf32>
    %400 = arith.mulf %398, %399 : vector<16x16xf32>
    %401 = arith.addf %395, %400 : vector<16x16xf32>
    %c64 = arith.constant 64 : index
    %402 = memref.load %arg2[%c64] : memref<98xf32, #tpu.memory_space<smem>>
    %c1_212 = arith.constant 1 : index
    %c2_213 = arith.constant 2 : index
    %c1_214 = arith.constant 1 : index
    %403 = vector.load %arg5[%c1_212, %c2_213, %c1_214] : memref<2x22x22xf32, #tpu.memory_space<vmem>>, vector<1x16x16xf32>
    %404 = vector.shape_cast %403 : vector<1x16x16xf32> to vector<16x16xf32>
    %405 = vector.broadcast %402 : f32 to vector<16x16xf32>
    %406 = arith.mulf %404, %405 : vector<16x16xf32>
    %407 = arith.addf %401, %406 : vector<16x16xf32>
    %c65 = arith.constant 65 : index
    %408 = memref.load %arg2[%c65] : memref<98xf32, #tpu.memory_space<smem>>
    %c1_215 = arith.constant 1 : index
    %c2_216 = arith.constant 2 : index
    %c2_217 = arith.constant 2 : index
    %409 = vector.load %arg5[%c1_215, %c2_216, %c2_217] : memref<2x22x22xf32, #tpu.memory_space<vmem>>, vector<1x16x16xf32>
    %410 = vector.shape_cast %409 : vector<1x16x16xf32> to vector<16x16xf32>
    %411 = vector.broadcast %408 : f32 to vector<16x16xf32>
    %412 = arith.mulf %410, %411 : vector<16x16xf32>
    %413 = arith.addf %407, %412 : vector<16x16xf32>
    %c66 = arith.constant 66 : index
    %414 = memref.load %arg2[%c66] : memref<98xf32, #tpu.memory_space<smem>>
    %c1_218 = arith.constant 1 : index
    %c2_219 = arith.constant 2 : index
    %c3_220 = arith.constant 3 : index
    %415 = vector.load %arg5[%c1_218, %c2_219, %c3_220] : memref<2x22x22xf32, #tpu.memory_space<vmem>>, vector<1x16x16xf32>
    %416 = vector.shape_cast %415 : vector<1x16x16xf32> to vector<16x16xf32>
    %417 = vector.broadcast %414 : f32 to vector<16x16xf32>
    %418 = arith.mulf %416, %417 : vector<16x16xf32>
    %419 = arith.addf %413, %418 : vector<16x16xf32>
    %c67 = arith.constant 67 : index
    %420 = memref.load %arg2[%c67] : memref<98xf32, #tpu.memory_space<smem>>
    %c1_221 = arith.constant 1 : index
    %c2_222 = arith.constant 2 : index
    %c4_223 = arith.constant 4 : index
    %421 = vector.load %arg5[%c1_221, %c2_222, %c4_223] : memref<2x22x22xf32, #tpu.memory_space<vmem>>, vector<1x16x16xf32>
    %422 = vector.shape_cast %421 : vector<1x16x16xf32> to vector<16x16xf32>
    %423 = vector.broadcast %420 : f32 to vector<16x16xf32>
    %424 = arith.mulf %422, %423 : vector<16x16xf32>
    %425 = arith.addf %419, %424 : vector<16x16xf32>
    %c68 = arith.constant 68 : index
    %426 = memref.load %arg2[%c68] : memref<98xf32, #tpu.memory_space<smem>>
    %c1_224 = arith.constant 1 : index
    %c2_225 = arith.constant 2 : index
    %c5_226 = arith.constant 5 : index
    %427 = vector.load %arg5[%c1_224, %c2_225, %c5_226] : memref<2x22x22xf32, #tpu.memory_space<vmem>>, vector<1x16x16xf32>
    %428 = vector.shape_cast %427 : vector<1x16x16xf32> to vector<16x16xf32>
    %429 = vector.broadcast %426 : f32 to vector<16x16xf32>
    %430 = arith.mulf %428, %429 : vector<16x16xf32>
    %431 = arith.addf %425, %430 : vector<16x16xf32>
    %c69 = arith.constant 69 : index
    %432 = memref.load %arg2[%c69] : memref<98xf32, #tpu.memory_space<smem>>
    %c1_227 = arith.constant 1 : index
    %c2_228 = arith.constant 2 : index
    %c6_229 = arith.constant 6 : index
    %433 = vector.load %arg5[%c1_227, %c2_228, %c6_229] : memref<2x22x22xf32, #tpu.memory_space<vmem>>, vector<1x16x16xf32>
    %434 = vector.shape_cast %433 : vector<1x16x16xf32> to vector<16x16xf32>
    %435 = vector.broadcast %432 : f32 to vector<16x16xf32>
    %436 = arith.mulf %434, %435 : vector<16x16xf32>
    %437 = arith.addf %431, %436 : vector<16x16xf32>
    %c70 = arith.constant 70 : index
    %438 = memref.load %arg2[%c70] : memref<98xf32, #tpu.memory_space<smem>>
    %c1_230 = arith.constant 1 : index
    %c3_231 = arith.constant 3 : index
    %c0_232 = arith.constant 0 : index
    %439 = vector.load %arg5[%c1_230, %c3_231, %c0_232] : memref<2x22x22xf32, #tpu.memory_space<vmem>>, vector<1x16x16xf32>
    %440 = vector.shape_cast %439 : vector<1x16x16xf32> to vector<16x16xf32>
    %441 = vector.broadcast %438 : f32 to vector<16x16xf32>
    %442 = arith.mulf %440, %441 : vector<16x16xf32>
    %443 = arith.addf %437, %442 : vector<16x16xf32>
    %c71 = arith.constant 71 : index
    %444 = memref.load %arg2[%c71] : memref<98xf32, #tpu.memory_space<smem>>
    %c1_233 = arith.constant 1 : index
    %c3_234 = arith.constant 3 : index
    %c1_235 = arith.constant 1 : index
    %445 = vector.load %arg5[%c1_233, %c3_234, %c1_235] : memref<2x22x22xf32, #tpu.memory_space<vmem>>, vector<1x16x16xf32>
    %446 = vector.shape_cast %445 : vector<1x16x16xf32> to vector<16x16xf32>
    %447 = vector.broadcast %444 : f32 to vector<16x16xf32>
    %448 = arith.mulf %446, %447 : vector<16x16xf32>
    %449 = arith.addf %443, %448 : vector<16x16xf32>
    %c72 = arith.constant 72 : index
    %450 = memref.load %arg2[%c72] : memref<98xf32, #tpu.memory_space<smem>>
    %c1_236 = arith.constant 1 : index
    %c3_237 = arith.constant 3 : index
    %c2_238 = arith.constant 2 : index
    %451 = vector.load %arg5[%c1_236, %c3_237, %c2_238] : memref<2x22x22xf32, #tpu.memory_space<vmem>>, vector<1x16x16xf32>
    %452 = vector.shape_cast %451 : vector<1x16x16xf32> to vector<16x16xf32>
    %453 = vector.broadcast %450 : f32 to vector<16x16xf32>
    %454 = arith.mulf %452, %453 : vector<16x16xf32>
    %455 = arith.addf %449, %454 : vector<16x16xf32>
    %c73 = arith.constant 73 : index
    %456 = memref.load %arg2[%c73] : memref<98xf32, #tpu.memory_space<smem>>
    %c1_239 = arith.constant 1 : index
    %c3_240 = arith.constant 3 : index
    %c3_241 = arith.constant 3 : index
    %457 = vector.load %arg5[%c1_239, %c3_240, %c3_241] : memref<2x22x22xf32, #tpu.memory_space<vmem>>, vector<1x16x16xf32>
    %458 = vector.shape_cast %457 : vector<1x16x16xf32> to vector<16x16xf32>
    %459 = vector.broadcast %456 : f32 to vector<16x16xf32>
    %460 = arith.mulf %458, %459 : vector<16x16xf32>
    %461 = arith.addf %455, %460 : vector<16x16xf32>
    %c74 = arith.constant 74 : index
    %462 = memref.load %arg2[%c74] : memref<98xf32, #tpu.memory_space<smem>>
    %c1_242 = arith.constant 1 : index
    %c3_243 = arith.constant 3 : index
    %c4_244 = arith.constant 4 : index
    %463 = vector.load %arg5[%c1_242, %c3_243, %c4_244] : memref<2x22x22xf32, #tpu.memory_space<vmem>>, vector<1x16x16xf32>
    %464 = vector.shape_cast %463 : vector<1x16x16xf32> to vector<16x16xf32>
    %465 = vector.broadcast %462 : f32 to vector<16x16xf32>
    %466 = arith.mulf %464, %465 : vector<16x16xf32>
    %467 = arith.addf %461, %466 : vector<16x16xf32>
    %c75 = arith.constant 75 : index
    %468 = memref.load %arg2[%c75] : memref<98xf32, #tpu.memory_space<smem>>
    %c1_245 = arith.constant 1 : index
    %c3_246 = arith.constant 3 : index
    %c5_247 = arith.constant 5 : index
    %469 = vector.load %arg5[%c1_245, %c3_246, %c5_247] : memref<2x22x22xf32, #tpu.memory_space<vmem>>, vector<1x16x16xf32>
    %470 = vector.shape_cast %469 : vector<1x16x16xf32> to vector<16x16xf32>
    %471 = vector.broadcast %468 : f32 to vector<16x16xf32>
    %472 = arith.mulf %470, %471 : vector<16x16xf32>
    %473 = arith.addf %467, %472 : vector<16x16xf32>
    %c76 = arith.constant 76 : index
    %474 = memref.load %arg2[%c76] : memref<98xf32, #tpu.memory_space<smem>>
    %c1_248 = arith.constant 1 : index
    %c3_249 = arith.constant 3 : index
    %c6_250 = arith.constant 6 : index
    %475 = vector.load %arg5[%c1_248, %c3_249, %c6_250] : memref<2x22x22xf32, #tpu.memory_space<vmem>>, vector<1x16x16xf32>
    %476 = vector.shape_cast %475 : vector<1x16x16xf32> to vector<16x16xf32>
    %477 = vector.broadcast %474 : f32 to vector<16x16xf32>
    %478 = arith.mulf %476, %477 : vector<16x16xf32>
    %479 = arith.addf %473, %478 : vector<16x16xf32>
    %cst_251 = arith.constant 0.000000e+00 : f32
    %480 = vector.broadcast %cst_251 : f32 to vector<16x16xf32>
    %c77 = arith.constant 77 : index
    %481 = memref.load %arg2[%c77] : memref<98xf32, #tpu.memory_space<smem>>
    %c1_252 = arith.constant 1 : index
    %c4_253 = arith.constant 4 : index
    %c0_254 = arith.constant 0 : index
    %482 = vector.load %arg5[%c1_252, %c4_253, %c0_254] : memref<2x22x22xf32, #tpu.memory_space<vmem>>, vector<1x16x16xf32>
    %483 = vector.shape_cast %482 : vector<1x16x16xf32> to vector<16x16xf32>
    %484 = vector.broadcast %481 : f32 to vector<16x16xf32>
    %485 = arith.mulf %483, %484 : vector<16x16xf32>
    %486 = arith.addf %480, %485 : vector<16x16xf32>
    %c78 = arith.constant 78 : index
    %487 = memref.load %arg2[%c78] : memref<98xf32, #tpu.memory_space<smem>>
    %c1_255 = arith.constant 1 : index
    %c4_256 = arith.constant 4 : index
    %c1_257 = arith.constant 1 : index
    %488 = vector.load %arg5[%c1_255, %c4_256, %c1_257] : memref<2x22x22xf32, #tpu.memory_space<vmem>>, vector<1x16x16xf32>
    %489 = vector.shape_cast %488 : vector<1x16x16xf32> to vector<16x16xf32>
    %490 = vector.broadcast %487 : f32 to vector<16x16xf32>
    %491 = arith.mulf %489, %490 : vector<16x16xf32>
    %492 = arith.addf %486, %491 : vector<16x16xf32>
    %c79 = arith.constant 79 : index
    %493 = memref.load %arg2[%c79] : memref<98xf32, #tpu.memory_space<smem>>
    %c1_258 = arith.constant 1 : index
    %c4_259 = arith.constant 4 : index
    %c2_260 = arith.constant 2 : index
    %494 = vector.load %arg5[%c1_258, %c4_259, %c2_260] : memref<2x22x22xf32, #tpu.memory_space<vmem>>, vector<1x16x16xf32>
    %495 = vector.shape_cast %494 : vector<1x16x16xf32> to vector<16x16xf32>
    %496 = vector.broadcast %493 : f32 to vector<16x16xf32>
    %497 = arith.mulf %495, %496 : vector<16x16xf32>
    %498 = arith.addf %492, %497 : vector<16x16xf32>
    %c80 = arith.constant 80 : index
    %499 = memref.load %arg2[%c80] : memref<98xf32, #tpu.memory_space<smem>>
    %c1_261 = arith.constant 1 : index
    %c4_262 = arith.constant 4 : index
    %c3_263 = arith.constant 3 : index
    %500 = vector.load %arg5[%c1_261, %c4_262, %c3_263] : memref<2x22x22xf32, #tpu.memory_space<vmem>>, vector<1x16x16xf32>
    %501 = vector.shape_cast %500 : vector<1x16x16xf32> to vector<16x16xf32>
    %502 = vector.broadcast %499 : f32 to vector<16x16xf32>
    %503 = arith.mulf %501, %502 : vector<16x16xf32>
    %504 = arith.addf %498, %503 : vector<16x16xf32>
    %c81 = arith.constant 81 : index
    %505 = memref.load %arg2[%c81] : memref<98xf32, #tpu.memory_space<smem>>
    %c1_264 = arith.constant 1 : index
    %c4_265 = arith.constant 4 : index
    %c4_266 = arith.constant 4 : index
    %506 = vector.load %arg5[%c1_264, %c4_265, %c4_266] : memref<2x22x22xf32, #tpu.memory_space<vmem>>, vector<1x16x16xf32>
    %507 = vector.shape_cast %506 : vector<1x16x16xf32> to vector<16x16xf32>
    %508 = vector.broadcast %505 : f32 to vector<16x16xf32>
    %509 = arith.mulf %507, %508 : vector<16x16xf32>
    %510 = arith.addf %504, %509 : vector<16x16xf32>
    %c82 = arith.constant 82 : index
    %511 = memref.load %arg2[%c82] : memref<98xf32, #tpu.memory_space<smem>>
    %c1_267 = arith.constant 1 : index
    %c4_268 = arith.constant 4 : index
    %c5_269 = arith.constant 5 : index
    %512 = vector.load %arg5[%c1_267, %c4_268, %c5_269] : memref<2x22x22xf32, #tpu.memory_space<vmem>>, vector<1x16x16xf32>
    %513 = vector.shape_cast %512 : vector<1x16x16xf32> to vector<16x16xf32>
    %514 = vector.broadcast %511 : f32 to vector<16x16xf32>
    %515 = arith.mulf %513, %514 : vector<16x16xf32>
    %516 = arith.addf %510, %515 : vector<16x16xf32>
    %c83 = arith.constant 83 : index
    %517 = memref.load %arg2[%c83] : memref<98xf32, #tpu.memory_space<smem>>
    %c1_270 = arith.constant 1 : index
    %c4_271 = arith.constant 4 : index
    %c6_272 = arith.constant 6 : index
    %518 = vector.load %arg5[%c1_270, %c4_271, %c6_272] : memref<2x22x22xf32, #tpu.memory_space<vmem>>, vector<1x16x16xf32>
    %519 = vector.shape_cast %518 : vector<1x16x16xf32> to vector<16x16xf32>
    %520 = vector.broadcast %517 : f32 to vector<16x16xf32>
    %521 = arith.mulf %519, %520 : vector<16x16xf32>
    %522 = arith.addf %516, %521 : vector<16x16xf32>
    %c84 = arith.constant 84 : index
    %523 = memref.load %arg2[%c84] : memref<98xf32, #tpu.memory_space<smem>>
    %c1_273 = arith.constant 1 : index
    %c5_274 = arith.constant 5 : index
    %c0_275 = arith.constant 0 : index
    %524 = vector.load %arg5[%c1_273, %c5_274, %c0_275] : memref<2x22x22xf32, #tpu.memory_space<vmem>>, vector<1x16x16xf32>
    %525 = vector.shape_cast %524 : vector<1x16x16xf32> to vector<16x16xf32>
    %526 = vector.broadcast %523 : f32 to vector<16x16xf32>
    %527 = arith.mulf %525, %526 : vector<16x16xf32>
    %528 = arith.addf %522, %527 : vector<16x16xf32>
    %c85 = arith.constant 85 : index
    %529 = memref.load %arg2[%c85] : memref<98xf32, #tpu.memory_space<smem>>
    %c1_276 = arith.constant 1 : index
    %c5_277 = arith.constant 5 : index
    %c1_278 = arith.constant 1 : index
    %530 = vector.load %arg5[%c1_276, %c5_277, %c1_278] : memref<2x22x22xf32, #tpu.memory_space<vmem>>, vector<1x16x16xf32>
    %531 = vector.shape_cast %530 : vector<1x16x16xf32> to vector<16x16xf32>
    %532 = vector.broadcast %529 : f32 to vector<16x16xf32>
    %533 = arith.mulf %531, %532 : vector<16x16xf32>
    %534 = arith.addf %528, %533 : vector<16x16xf32>
    %c86 = arith.constant 86 : index
    %535 = memref.load %arg2[%c86] : memref<98xf32, #tpu.memory_space<smem>>
    %c1_279 = arith.constant 1 : index
    %c5_280 = arith.constant 5 : index
    %c2_281 = arith.constant 2 : index
    %536 = vector.load %arg5[%c1_279, %c5_280, %c2_281] : memref<2x22x22xf32, #tpu.memory_space<vmem>>, vector<1x16x16xf32>
    %537 = vector.shape_cast %536 : vector<1x16x16xf32> to vector<16x16xf32>
    %538 = vector.broadcast %535 : f32 to vector<16x16xf32>
    %539 = arith.mulf %537, %538 : vector<16x16xf32>
    %540 = arith.addf %534, %539 : vector<16x16xf32>
    %c87 = arith.constant 87 : index
    %541 = memref.load %arg2[%c87] : memref<98xf32, #tpu.memory_space<smem>>
    %c1_282 = arith.constant 1 : index
    %c5_283 = arith.constant 5 : index
    %c3_284 = arith.constant 3 : index
    %542 = vector.load %arg5[%c1_282, %c5_283, %c3_284] : memref<2x22x22xf32, #tpu.memory_space<vmem>>, vector<1x16x16xf32>
    %543 = vector.shape_cast %542 : vector<1x16x16xf32> to vector<16x16xf32>
    %544 = vector.broadcast %541 : f32 to vector<16x16xf32>
    %545 = arith.mulf %543, %544 : vector<16x16xf32>
    %546 = arith.addf %540, %545 : vector<16x16xf32>
    %c88 = arith.constant 88 : index
    %547 = memref.load %arg2[%c88] : memref<98xf32, #tpu.memory_space<smem>>
    %c1_285 = arith.constant 1 : index
    %c5_286 = arith.constant 5 : index
    %c4_287 = arith.constant 4 : index
    %548 = vector.load %arg5[%c1_285, %c5_286, %c4_287] : memref<2x22x22xf32, #tpu.memory_space<vmem>>, vector<1x16x16xf32>
    %549 = vector.shape_cast %548 : vector<1x16x16xf32> to vector<16x16xf32>
    %550 = vector.broadcast %547 : f32 to vector<16x16xf32>
    %551 = arith.mulf %549, %550 : vector<16x16xf32>
    %552 = arith.addf %546, %551 : vector<16x16xf32>
    %c89 = arith.constant 89 : index
    %553 = memref.load %arg2[%c89] : memref<98xf32, #tpu.memory_space<smem>>
    %c1_288 = arith.constant 1 : index
    %c5_289 = arith.constant 5 : index
    %c5_290 = arith.constant 5 : index
    %554 = vector.load %arg5[%c1_288, %c5_289, %c5_290] : memref<2x22x22xf32, #tpu.memory_space<vmem>>, vector<1x16x16xf32>
    %555 = vector.shape_cast %554 : vector<1x16x16xf32> to vector<16x16xf32>
    %556 = vector.broadcast %553 : f32 to vector<16x16xf32>
    %557 = arith.mulf %555, %556 : vector<16x16xf32>
    %558 = arith.addf %552, %557 : vector<16x16xf32>
    %c90 = arith.constant 90 : index
    %559 = memref.load %arg2[%c90] : memref<98xf32, #tpu.memory_space<smem>>
    %c1_291 = arith.constant 1 : index
    %c5_292 = arith.constant 5 : index
    %c6_293 = arith.constant 6 : index
    %560 = vector.load %arg5[%c1_291, %c5_292, %c6_293] : memref<2x22x22xf32, #tpu.memory_space<vmem>>, vector<1x16x16xf32>
    %561 = vector.shape_cast %560 : vector<1x16x16xf32> to vector<16x16xf32>
    %562 = vector.broadcast %559 : f32 to vector<16x16xf32>
    %563 = arith.mulf %561, %562 : vector<16x16xf32>
    %564 = arith.addf %558, %563 : vector<16x16xf32>
    %c91 = arith.constant 91 : index
    %565 = memref.load %arg2[%c91] : memref<98xf32, #tpu.memory_space<smem>>
    %c1_294 = arith.constant 1 : index
    %c6_295 = arith.constant 6 : index
    %c0_296 = arith.constant 0 : index
    %566 = vector.load %arg5[%c1_294, %c6_295, %c0_296] : memref<2x22x22xf32, #tpu.memory_space<vmem>>, vector<1x16x16xf32>
    %567 = vector.shape_cast %566 : vector<1x16x16xf32> to vector<16x16xf32>
    %568 = vector.broadcast %565 : f32 to vector<16x16xf32>
    %569 = arith.mulf %567, %568 : vector<16x16xf32>
    %570 = arith.addf %564, %569 : vector<16x16xf32>
    %c92 = arith.constant 92 : index
    %571 = memref.load %arg2[%c92] : memref<98xf32, #tpu.memory_space<smem>>
    %c1_297 = arith.constant 1 : index
    %c6_298 = arith.constant 6 : index
    %c1_299 = arith.constant 1 : index
    %572 = vector.load %arg5[%c1_297, %c6_298, %c1_299] : memref<2x22x22xf32, #tpu.memory_space<vmem>>, vector<1x16x16xf32>
    %573 = vector.shape_cast %572 : vector<1x16x16xf32> to vector<16x16xf32>
    %574 = vector.broadcast %571 : f32 to vector<16x16xf32>
    %575 = arith.mulf %573, %574 : vector<16x16xf32>
    %576 = arith.addf %570, %575 : vector<16x16xf32>
    %c93 = arith.constant 93 : index
    %577 = memref.load %arg2[%c93] : memref<98xf32, #tpu.memory_space<smem>>
    %c1_300 = arith.constant 1 : index
    %c6_301 = arith.constant 6 : index
    %c2_302 = arith.constant 2 : index
    %578 = vector.load %arg5[%c1_300, %c6_301, %c2_302] : memref<2x22x22xf32, #tpu.memory_space<vmem>>, vector<1x16x16xf32>
    %579 = vector.shape_cast %578 : vector<1x16x16xf32> to vector<16x16xf32>
    %580 = vector.broadcast %577 : f32 to vector<16x16xf32>
    %581 = arith.mulf %579, %580 : vector<16x16xf32>
    %582 = arith.addf %576, %581 : vector<16x16xf32>
    %c94 = arith.constant 94 : index
    %583 = memref.load %arg2[%c94] : memref<98xf32, #tpu.memory_space<smem>>
    %c1_303 = arith.constant 1 : index
    %c6_304 = arith.constant 6 : index
    %c3_305 = arith.constant 3 : index
    %584 = vector.load %arg5[%c1_303, %c6_304, %c3_305] : memref<2x22x22xf32, #tpu.memory_space<vmem>>, vector<1x16x16xf32>
    %585 = vector.shape_cast %584 : vector<1x16x16xf32> to vector<16x16xf32>
    %586 = vector.broadcast %583 : f32 to vector<16x16xf32>
    %587 = arith.mulf %585, %586 : vector<16x16xf32>
    %588 = arith.addf %582, %587 : vector<16x16xf32>
    %c95 = arith.constant 95 : index
    %589 = memref.load %arg2[%c95] : memref<98xf32, #tpu.memory_space<smem>>
    %c1_306 = arith.constant 1 : index
    %c6_307 = arith.constant 6 : index
    %c4_308 = arith.constant 4 : index
    %590 = vector.load %arg5[%c1_306, %c6_307, %c4_308] : memref<2x22x22xf32, #tpu.memory_space<vmem>>, vector<1x16x16xf32>
    %591 = vector.shape_cast %590 : vector<1x16x16xf32> to vector<16x16xf32>
    %592 = vector.broadcast %589 : f32 to vector<16x16xf32>
    %593 = arith.mulf %591, %592 : vector<16x16xf32>
    %594 = arith.addf %588, %593 : vector<16x16xf32>
    %c96 = arith.constant 96 : index
    %595 = memref.load %arg2[%c96] : memref<98xf32, #tpu.memory_space<smem>>
    %c1_309 = arith.constant 1 : index
    %c6_310 = arith.constant 6 : index
    %c5_311 = arith.constant 5 : index
    %596 = vector.load %arg5[%c1_309, %c6_310, %c5_311] : memref<2x22x22xf32, #tpu.memory_space<vmem>>, vector<1x16x16xf32>
    %597 = vector.shape_cast %596 : vector<1x16x16xf32> to vector<16x16xf32>
    %598 = vector.broadcast %595 : f32 to vector<16x16xf32>
    %599 = arith.mulf %597, %598 : vector<16x16xf32>
    %600 = arith.addf %594, %599 : vector<16x16xf32>
    %c97 = arith.constant 97 : index
    %601 = memref.load %arg2[%c97] : memref<98xf32, #tpu.memory_space<smem>>
    %c1_312 = arith.constant 1 : index
    %c6_313 = arith.constant 6 : index
    %c6_314 = arith.constant 6 : index
    %602 = vector.load %arg5[%c1_312, %c6_313, %c6_314] : memref<2x22x22xf32, #tpu.memory_space<vmem>>, vector<1x16x16xf32>
    %603 = vector.shape_cast %602 : vector<1x16x16xf32> to vector<16x16xf32>
    %604 = vector.broadcast %601 : f32 to vector<16x16xf32>
    %605 = arith.mulf %603, %604 : vector<16x16xf32>
    %606 = arith.addf %600, %605 : vector<16x16xf32>
    %607 = arith.addf %183, %310 : vector<16x16xf32>
    %608 = arith.addf %479, %606 : vector<16x16xf32>
    %609 = arith.addf %607, %608 : vector<16x16xf32>
    %610 = vector.broadcast %14 : f32 to vector<16x16xf32>
    %611 = arith.addf %609, %610 : vector<16x16xf32>
    %612 = arith.negf %611 : vector<16x16xf32>
    %613 = math.exp %612 : vector<16x16xf32>
    %cst_315 = arith.constant 1.000000e+00 : f32
    %614 = vector.broadcast %cst_315 : f32 to vector<16x16xf32>
    %615 = arith.addf %614, %613 : vector<16x16xf32>
    %616 = arith.divf %614, %615 : vector<16x16xf32>
    %617 = vector.shape_cast %616 : vector<16x16xf32> to vector<1x16x16xf32>
    %618 = vector.broadcast %617 : vector<1x16x16xf32> to vector<4x16x16xf32>
    %619 = arith.mulf %1, %618 : vector<4x16x16xf32>
    %c0_316 = arith.constant 0 : index
    %c0_317 = arith.constant 0 : index
    %c0_318 = arith.constant 0 : index
    %c0_319 = arith.constant 0 : index
    %620 = vector.load %arg4[%c0_316, %c0_317, %c0_318, %c0_319] : memref<1x4x16x16xf32, #tpu.memory_space<vmem>>, vector<1x4x16x16xf32>
    %621 = vector.shape_cast %620 : vector<1x4x16x16xf32> to vector<4x16x16xf32>
    %622 = vector.shape_cast %619 : vector<4x16x16xf32> to vector<1x4x16x16xf32>
    tpu.vector_store %arg4[%c0_316, %c0_317, %c0_318, %c0_319], %622 {strides = array<i32>} : memref<1x4x16x16xf32, #tpu.memory_space<vmem>>, vector<1x4x16x16xf32>,
    return
  }
  func.func @transform_0(%arg0: i32) -> (i32, i32, i32, i32) {
    %c0_i32 = arith.constant 0 : i32
    %c0_i32_0 = arith.constant 0 : i32
    %c0_i32_1 = arith.constant 0 : i32
    %c0_i32_2 = arith.constant 0 : i32
    return %arg0, %c0_i32, %c0_i32_0, %c0_i32_1 : i32, i32, i32, i32
  }
  func.func @transform_1(%arg0: i32) -> i32 {
    %c0_i32 = arith.constant 0 : i32
    %c0_i32_0 = arith.constant 0 : i32
    return %c0_i32 : i32
  }
  func.func @transform_2(%arg0: i32) -> i32 {
    %c0_i32 = arith.constant 0 : i32
    %c0_i32_0 = arith.constant 0 : i32
    return %c0_i32 : i32
  }
  func.func @transform_3(%arg0: i32) -> (i32, i32, i32, i32) {
    %c0_i32 = arith.constant 0 : i32
    %c0_i32_0 = arith.constant 0 : i32
    %c0_i32_1 = arith.constant 0 : i32
    %c0_i32_2 = arith.constant 0 : i32
    return %arg0, %c0_i32, %c0_i32_0, %c0_i32_1 : i32, i32, i32, i32
  }
}

</mosaic_0001>

<llo_original>
// kernel: tpu_custom_call.1
$region0: #{tpu_custom_call.1}
  #allocation0 [shape = 'u32[]', space=smem, size = 0x4, offset = 0x4, fixed_abs, tag = 'smem constant byte address 0x4 - core index']
  #allocation1 [shape = 'u32[144,128]{1,0:T(1,128)}', space=vmem, size = 0x12000, scoped, tag = 'internal scratch']
  #allocation2 [shape = 'f32[2,22,22]{2,1,0:T(8,128)}', space=vmem, size = 0x6000, scoped, tag = 'scratch operand']
  #allocation3 [shape = 'f32[1]{0:T(128)S(6)}', space=smem, size = 0x200, scoped, tag = 'scoped memory for tpu_custom_call.1']
  %s0 = inlined_call_operand.hbm [shape: f32[2,4,16,16], index: 0, kind: input, shape index: {}]
  %s1 = inlined_call_operand.vmem [shape: f32[98], index: 1, kind: input, shape index: {}]
  %s2 = inlined_call_operand.<no memory space> [shape: f32[1], index: 2, kind: input, shape index: {}]
  %s3 = inlined_call_operand.hbm [shape: f32[2,4,16,16], index: 3, kind: output, shape index: {}]
  %s4 = sld [smem:[#allocation0]]
  $region53: #{tpu_custom_call.1} parent=0
    _
  %s6 = ssub.s32 1, %s4
  %s7 = scalar_select 0, %s6, %s4
  %8 = sst [smem:[#allocation3]] %s2
  $region1: #{tpu_custom_call.1} parent=0
    #allocation4 [shape = 'u8[65536]{0}', space=vmem, size = 0x10000, scoped, tag = 'input window, operand 0']
    #allocation5 [shape = 's32[2]{0}', space=sflag, size = 0x8, scoped, tag = 'scoped memory for tpu_custom_call.1']
    #allocation6 [shape = 's32[2]{0}', space=sflag, size = 0x8, scoped, tag = 'scoped memory for tpu_custom_call.1']
    #allocation7 [shape = 's32[2]{0}', space=sflag, size = 0x8, scoped, tag = 'scoped memory for tpu_custom_call.1']
    #allocation8 [shape = 'u8[512]{0}', space=smem, size = 0x200, scoped, tag = 'input window, operand 1, single buffered']
    #allocation9 [shape = 'u8[65536]{0}', space=vmem, size = 0x10000, scoped, tag = 'output window, operand 0']
    %9 = vsyncpa [#allocation5], 0
    %s10 = scalar_lea.sflag [#allocation5], 1
    %11 = vsyncpa %s10, 0
    %12 = vsyncpa [#allocation7], 0
    %13 = vsyncpa [#allocation6], 0
    %s14 = scalar_lea.sflag [#allocation6], 1
    %15 = vsyncpa %s14, 0
    loop: start=0, step=1, limit=4
    $region2: #{tpu_custom_call.1} parent=1 // loop_pre_header
      _
    $region3: #{tpu_custom_call.1} parent=1 // loop_header
      %s17 = sphi 0, %s21
      %p18 = scmp.ge.s32.totalorder %s17, 4
      %s27 = sphi 0, %s29
      %s30 = sphi 0, %s27
      %s31 = sphi 0, %s30
      %s47 = sphi 0, %s31
      %s51 = sphi 0, %s51
      %s53 = sphi 0, %s51
      %s54 = sphi 0, %s53
      %s68 = sphi 0, %s54
      %s72 = sphi 0, %s72
      %s74 = sphi 0, %s72
      %s75 = sphi 0, %s74
      %s89 = sphi 0, %s75
      %s95 = sphi 0, %s97
      %s98 = sphi 0, %s95
      %s99 = sphi 0, %s98
      %s115 = sphi 0, %s99
    $region4: #{tpu_custom_call.1} parent=1 // loop_header_branch
      %20 = sbr.rel (%p18) target = $region8
    $region5: #{tpu_custom_call.1} parent=1 // loop_body
      %s22 = ssub.s32 %s17, 1
      %s23 = ssub.s32 %s17, 2
      %s24 = sadd.s32 %s17, 1
      %s25 = ssub.s32 %s17, %s24
      %p26 = scmp.eq.s32.totalorder %s25, 0
      %s28 = sadd.s32 %s27, 1
      %s29 = scalar_select %p26, %s27, %s28
      %p32 = pneg %p26
      %p33 = scmp.eq.s32.totalorder %s17, 1
      %p34 = por %p32, %p33
      %p35 = scmp.ne.s32.totalorder %s27, %s30
      %p36 = scmp.eq.s32.totalorder %s17, 0
      %p37 = por %p35, %p36
      %p38 = scmp.ne.s32.totalorder %s27, %s30
      %p39 = scmp.eq.s32.totalorder %s22, 1
      %p40 = por %p38, %p39
      %p41 = scmp.ne.s32.totalorder %s30, %s31
      %p42 = scmp.eq.s32.totalorder %s22, 0
      %p43 = por %p41, %p42
      %p44 = scmp.ne.s32.totalorder %s30, %s31
      %p45 = scmp.eq.s32.totalorder %s23, 1
      %p46 = por %p44, %p45
      %p48 = scmp.ne.s32.totalorder %s31, %s47
      %p49 = scmp.eq.s32.totalorder %s23, 0
      %p50 = por %p48, %p49
      %s52 = sadd.s32 %s51, 1
      %p55 = scmp.eq.s32.totalorder %s17, 1
      %p56 = scmp.ne.s32.totalorder %s51, %s53
      %p57 = scmp.eq.s32.totalorder %s17, 0
      %p58 = por %p56, %p57
      %p59 = scmp.ne.s32.totalorder %s51, %s53
      %p60 = scmp.eq.s32.totalorder %s22, 1
      %p61 = por %p59, %p60
      %p62 = scmp.ne.s32.totalorder %s53, %s54
      %p63 = scmp.eq.s32.totalorder %s22, 0
      %p64 = por %p62, %p63
      %p65 = scmp.ne.s32.totalorder %s53, %s54
      %p66 = scmp.eq.s32.totalorder %s23, 1
      %p67 = por %p65, %p66
      %p69 = scmp.ne.s32.totalorder %s54, %s68
      %p70 = scmp.eq.s32.totalorder %s23, 0
      %p71 = por %p69, %p70
      %s73 = sadd.s32 %s72, 1
      %p76 = scmp.eq.s32.totalorder %s17, 1
      %p77 = scmp.ne.s32.totalorder %s72, %s74
      %p78 = scmp.eq.s32.totalorder %s17, 0
      %p79 = por %p77, %p78
      %p80 = scmp.ne.s32.totalorder %s72, %s74
      %p81 = scmp.eq.s32.totalorder %s22, 1
      %p82 = por %p80, %p81
      %p83 = scmp.ne.s32.totalorder %s74, %s75
      %p84 = scmp.eq.s32.totalorder %s22, 0
      %p85 = por %p83, %p84
      %p86 = scmp.ne.s32.totalorder %s74, %s75
      %p87 = scmp.eq.s32.totalorder %s23, 1
      %p88 = por %p86, %p87
      %p90 = scmp.ne.s32.totalorder %s75, %s89
      %p91 = scmp.eq.s32.totalorder %s23, 0
      %p92 = por %p90, %p91
      %s93 = ssub.s32 %s17, %s24
      %p94 = scmp.eq.s32.totalorder %s93, 0
      %s96 = sadd.s32 %s95, 1
      %s97 = scalar_select %p94, %s95, %s96
      %p100 = pneg %p94
      %p101 = scmp.eq.s32.totalorder %s17, 1
      %p102 = por %p100, %p101
      %p103 = scmp.ne.s32.totalorder %s95, %s98
      %p104 = scmp.eq.s32.totalorder %s17, 0
      %p105 = por %p103, %p104
      %p106 = scmp.ne.s32.totalorder %s95, %s98
      %p107 = scmp.eq.s32.totalorder %s22, 1
      %p108 = por %p106, %p107
      %p109 = scmp.ne.s32.totalorder %s98, %s99
      %p110 = scmp.eq.s32.totalorder %s22, 0
      %p111 = por %p109, %p110
      %p112 = scmp.ne.s32.totalorder %s98, %s99
      %p113 = scmp.eq.s32.totalorder %s23, 1
      %p114 = por %p112, %p113
      %p116 = scmp.ne.s32.totalorder %s99, %s115
      %p117 = scmp.eq.s32.totalorder %s23, 0
      %p118 = por %p116, %p117
      %p119 = scmp.le.s32.totalorder 1, %s17
      %p120 = scmp.lt.s32.totalorder %s17, 3
      %p121 = pnand %p119, %p120
      %p122 = pneg %p121
      // Predicated region
      $region9: #{tpu_custom_call.1} parent=5 // pred_check
        _
      $region10: #{tpu_custom_call.1} parent=5 // pred_check_branch
        %124 = sbr.rel (%p121) target = $region12
      $region11: #{tpu_custom_call.1} parent=5 // pred_region
        %s125 = ssub.s32 %s17, 1
        // Predicated region
        $region13: #{tpu_custom_call.1} parent=11 // pred_check
          %p126 = pneg %p64
        $region14: #{tpu_custom_call.1} parent=11 // pred_check_branch
          %128 = sbr.rel (%p126) target = $region16
        $region15: #{tpu_custom_call.1} parent=11 // pred_region
          %s130 = ssub.s32 16, 16
          %131 = vsyncadd [#allocation7], %s130
          %s133 = sshll.u32 %s1, 4
          %s134 = int_to_ptr.vmem [resolvable:$true] %s133
          %136 = dma.vmem_to_smem %s134, 16, [#allocation8], [#allocation7]
        $region16: #{tpu_custom_call.1} parent=11 // pred_fallthru
          _
        // Predicated region
        $region17: #{tpu_custom_call.1} parent=11 // pred_check
          %p137 = pneg %p85
        $region18: #{tpu_custom_call.1} parent=11 // pred_check_branch
          %139 = sbr.rel (%p137) target = $region20
        $region19: #{tpu_custom_call.1} parent=11 // pred_region
          _
        $region20: #{tpu_custom_call.1} parent=11 // pred_fallthru
          _
      $region12: #{tpu_custom_call.1} parent=5 // pred_fallthru
        _
      %p140 = scmp.lt.s32.totalorder %s17, 2
      // Predicated region
      $region21: #{tpu_custom_call.1} parent=5 // pred_check
        %p141 = pneg %p140
      $region22: #{tpu_custom_call.1} parent=5 // pred_check_branch
        %143 = sbr.rel (%p141) target = $region24
      $region23: #{tpu_custom_call.1} parent=5 // pred_region
        // Predicated region
        $region25: #{tpu_custom_call.1} parent=23 // pred_check
          %p144 = pneg %p37
        $region26: #{tpu_custom_call.1} parent=23 // pred_check_branch
          %146 = sbr.rel (%p144) target = $region28
        $region27: #{tpu_custom_call.1} parent=23 // pred_region
          %s147 = sand.u32 %s27, 1
          %s148 = scalar_lea.sflag [#allocation5], %s147
          %s149 = sand.u32 %s27, 1
          %s150 = smul.addr %s149, 64
          %s151 = scalar_lea.vmem [#allocation4], %s150
          %s153 = ssub.s32 1024, 1024
          %154 = vsyncadd %s148, %s153
          %s155 = smul.addr %s17, 8
          %s156 = smul.addr %s155, 128
          %s157 = scalar_lea.hbm %s0, %s156
          %s158 = sshll.u32 %s151, 4
          %s159 = int_to_ptr.vmem [resolvable:$true] %s158
          %164 = dma.hbm_to_vmem [thread:$0]  %s157, 1024, %s159, %s148, 128, 128, 8
        $region28: #{tpu_custom_call.1} parent=23 // pred_fallthru
          _
      $region24: #{tpu_custom_call.1} parent=5 // pred_fallthru
        _
      %p165 = scmp.le.s32.totalorder 1, %s17
      %p166 = scmp.lt.s32.totalorder %s17, 3
      %p167 = pnand %p165, %p166
      %p168 = pneg %p167
      // Predicated region
      $region29: #{tpu_custom_call.1} parent=5 // pred_check
        _
      $region30: #{tpu_custom_call.1} parent=5 // pred_check_branch
        %170 = sbr.rel (%p167) target = $region32
      $region31: #{tpu_custom_call.1} parent=5 // pred_region
        %s171 = ssub.s32 %s17, 1
        %s172 = sand.u32 %s30, 1
        %s173 = scalar_lea.sflag [#allocation5], %s172
        %s174 = sand.u32 %s30, 1
        %s175 = smul.addr %s174, 64
        %s176 = scalar_lea.vmem [#allocation4], %s175
        // Predicated region
        $region33: #{tpu_custom_call.1} parent=31 // pred_check
          %p177 = pneg %p43
        $region34: #{tpu_custom_call.1} parent=31 // pred_check_branch
          %179 = sbr.rel (%p177) target = $region36
        $region35: #{tpu_custom_call.1} parent=31 // pred_region
          %180 = dma.done %s173, 1024
        $region36: #{tpu_custom_call.1} parent=31 // pred_fallthru
          _
        // Predicated region
        $region37: #{tpu_custom_call.1} parent=31 // pred_check
          %p181 = pneg %p64
        $region38: #{tpu_custom_call.1} parent=31 // pred_check_branch
          %183 = sbr.rel (%p181) target = $region40
        $region39: #{tpu_custom_call.1} parent=31 // pred_region
          %184 = dma.done [#allocation7], 16
        $region40: #{tpu_custom_call.1} parent=31 // pred_fallthru
          _
        %185 = sfence
        %s186 = sand.u32 %s30, 1
        %s187 = scalar_lea.sflag [#allocation5], %s186
        %s188 = sand.u32 %s30, 1
        %s189 = smul.addr %s188, 64
        %s190 = scalar_lea.vmem [#allocation4], %s189
        %p191 = pneg %p43
        %p192 = pneg %p40
        %p193 = pneg %p64
        %p194 = pneg %p61
        %p195 = pneg %p85
        %p196 = pneg %p82
        %p197 = pneg %p111
        %p198 = pneg %p108
        %s199 = sand.u32 %s98, 1
        %s200 = scalar_lea.sflag [#allocation6], %s199
        %s201 = sand.u32 %s98, 1
        %s202 = smul.addr %s201, 64
        %s203 = scalar_lea.vmem [#allocation9], %s202
        %v204 = vld [vmem:[%s176] sm:$0xff]
        %v205 = vld [vmem:[%s176 + $0x8] sm:$0xff]
        %v206 = vld [vmem:[%s176 + $0x10] sm:$0xff]
        %v207 = vld [vmem:[%s176 + $0x18] sm:$0xff]
        %v208 = vld [vmem:[%s176 + $0x20] sm:$0xff]
        %v209 = vld [vmem:[%s176 + $0x28] sm:$0xff]
        %v210 = vld [vmem:[%s176 + $0x30] sm:$0xff]
        %v211 = vld [vmem:[%s176 + $0x38] sm:$0xff]
        %vm212 = vcmask 130048
        %v213 = vsel %vm212, %v204, -inf
        %v214 = vsel %vm212, %v206, -inf
        %v215 = vsel %vm212, %v208, -inf
        %v216 = vmax.f32 %v213, %v215
        %v217 = vsel %vm212, %v210, -inf
        %v218 = vmax.f32 %v214, %v217
        %v219 = vmax.f32 %v216, %v218
        %v220 = vsel %vm212, %v205, -inf
        %v221 = vsel %vm212, %v207, -inf
        %v222 = vsel %vm212, %v209, -inf
        %v223 = vmax.f32 %v220, %v222
        %v224 = vsel %vm212, %v211, -inf
        %v225 = vmax.f32 %v221, %v224
        %v226 = vmax.f32 %v223, %v225
        %v227 = vsel %vm212, %v204, 0.0
        %v228 = vsel %vm212, %v206, 0.0
        %v229 = vadd.f32 %v227, %v228
        %v230 = vsel %vm212, %v208, 0.0
        %v231 = vadd.f32 %v229, %v230
        %v232 = vsel %vm212, %v210, 0.0
        %v233 = vadd.f32 %v231, %v232
        %v234 = vsel %vm212, %v205, 0.0
        %v235 = vsel %vm212, %v207, 0.0
        %v236 = vadd.f32 %v234, %v235
        %v237 = vsel %vm212, %v209, 0.0
        %v238 = vadd.f32 %v236, %v237
        %v239 = vsel %vm212, %v211, 0.0
        %v240 = vadd.f32 %v238, %v239
        %v241 = vmul.f32 %v233, 0.25
        %v242 = vmul.f32 %v240, 0.25
        %vm243 = vcmask 179200
        %244 = vst.msk [vmem:[#allocation2] sm:$0xff] %vm243, 0.0
        %245 = vst.msk [vmem:[#allocation2 + $0x8] sm:$0xff] %vm243, 0.0
        %vm246 = vcmask 177152
        %247 = vst.msk [vmem:[#allocation2 + $0x10] sm:$0x3f] %vm246, 0.0
        %248 = vst.msk [vmem:[#allocation2 + $0x18] sm:$0xff] %vm243, 0.0
        %249 = vst.msk [vmem:[#allocation2 + $0x20] sm:$0xff] %vm243, 0.0
        %250 = vst.msk [vmem:[#allocation2 + $0x28] sm:$0x3f] %vm246, 0.0
        %253 = vrot.lane.b32.xlu0 %v219, 3
        %v254 = vpop.permute.xlu0 %253
        %255 = vrot.lane.b32.xlu0 %v226, 3
        %v256 = vpop.permute.xlu0 %255
        %vm259 = vcmask 154648
        %260 = vst.msk [vmem:[#allocation2 + $0x3] sm:$0xff] %vm259, %v254
        %261 = vst.msk [vmem:[#allocation2 + $0xb] sm:$0xff] %vm259, %v256
        %264 = vrot.lane.b32.xlu0 %v241, 3
        %v265 = vpop.permute.xlu0 %264
        %266 = vrot.lane.b32.xlu0 %v242, 3
        %v267 = vpop.permute.xlu0 %266
        %s270 = scalar_lea.vmem [#allocation2], 24
        %271 = vst.msk [vmem:[%s270 + $0x3] sm:$0xff] %vm259, %v265
        %272 = vst.msk [vmem:[%s270 + $0xb] sm:$0xff] %vm259, %v267
        %s273 = sld [smem:[#allocation3]]
        %s274 = sld [smem:[#allocation8]]
        %v275 = vld [vmem:[#allocation2] sm:$0xff]
        %v276 = vld [vmem:[#allocation2 + $0x8] sm:$0xff]
        %v277 = vstv %s274
        %v278 = vmul.f32 %v275, %v277
        %v279 = vmul.f32 %v276, %v277
        %v280 = vadd.f32 %v278, 0.0
        %v281 = vadd.f32 %v279, 0.0
        %s282 = sld [smem:[#allocation8 + $0x1]]
        %v283 = vstv %s282
        %v284 = vmul.f32 %v275, %v283
        %v285 = vmul.f32 %v276, %v283
        %288 = vrot.lane.b32.xlu0 %v284, 127
        %v289 = vpop.permute.xlu0 %288
        %290 = vrot.lane.b32.xlu0 %v285, 127
        %v291 = vpop.permute.xlu0 %290
        %v294 = vadd.f32 %v280, %v289
        %v295 = vadd.f32 %v281, %v291
        %s296 = sld [smem:[#allocation8 + $0x2]]
        %v297 = vstv %s296
        %v298 = vmul.f32 %v275, %v297
        %v299 = vmul.f32 %v276, %v297
        %302 = vrot.lane.b32.xlu0 %v298, 126
        %v303 = vpop.permute.xlu0 %302
        %304 = vrot.lane.b32.xlu0 %v299, 126
        %v305 = vpop.permute.xlu0 %304
        %v308 = vadd.f32 %v294, %v303
        %v309 = vadd.f32 %v295, %v305
        %s310 = sld [smem:[#allocation8 + $0x3]]
        %v311 = vstv %s310
        %v312 = vmul.f32 %v275, %v311
        %v313 = vmul.f32 %v276, %v311
        %316 = vrot.lane.b32.xlu0 %v312, 125
        %v317 = vpop.permute.xlu0 %316
        %318 = vrot.lane.b32.xlu0 %v313, 125
        %v319 = vpop.permute.xlu0 %318
        %v322 = vadd.f32 %v308, %v317
        %v323 = vadd.f32 %v309, %v319
        %s324 = sld [smem:[#allocation8 + $0x4]]
        %v325 = vstv %s324
        %v326 = vmul.f32 %v275, %v325
        %v327 = vmul.f32 %v276, %v325
        %330 = vrot.lane.b32.xlu0 %v326, 124
        %v331 = vpop.permute.xlu0 %330
        %332 = vrot.lane.b32.xlu0 %v327, 124
        %v333 = vpop.permute.xlu0 %332
        %v336 = vadd.f32 %v322, %v331
        %v337 = vadd.f32 %v323, %v333
        %s338 = sld [smem:[#allocation8 + $0x5]]
        %v339 = vstv %s338
        %v340 = vmul.f32 %v275, %v339
        %v341 = vmul.f32 %v276, %v339
        %344 = vrot.lane.b32.xlu0 %v340, 123
        %v345 = vpop.permute.xlu0 %344
        %346 = vrot.lane.b32.xlu0 %v341, 123
        %v347 = vpop.permute.xlu0 %346
        %v350 = vadd.f32 %v336, %v345
        %v351 = vadd.f32 %v337, %v347
        %s352 = sld [smem:[#allocation8 + $0x6]]
        %v353 = vstv %s352
        %v354 = vmul.f32 %v275, %v353
        %v355 = vmul.f32 %v276, %v353
        %358 = vrot.lane.b32.xlu0 %v354, 122
        %v359 = vpop.permute.xlu0 %358
        %360 = vrot.lane.b32.xlu0 %v355, 122
        %v361 = vpop.permute.xlu0 %360
        %v364 = vadd.f32 %v350, %v359
        %v365 = vadd.f32 %v351, %v361
        %s366 = sld [smem:[#allocation8 + $0x7]]
        %v367 = vld [vmem:[#allocation2 + $0x1] sm:$0xff]
        %v368 = vld [vmem:[#allocation2 + $0x9] sm:$0xff]
        %v369 = vstv %s366
        %v370 = vmul.f32 %v367, %v369
        %v371 = vmul.f32 %v368, %v369
        %v372 = vadd.f32 %v364, %v370
        %v373 = vadd.f32 %v365, %v371
        %s374 = sld [smem:[#allocation8 + $0x8]]
        %v375 = vstv %s374
        %v376 = vmul.f32 %v367, %v375
        %v377 = vmul.f32 %v368, %v375
        %380 = vrot.lane.b32.xlu0 %v376, 127
        %v381 = vpop.permute.xlu0 %380
        %382 = vrot.lane.b32.xlu0 %v377, 127
        %v383 = vpop.permute.xlu0 %382
        %v386 = vadd.f32 %v372, %v381
        %v387 = vadd.f32 %v373, %v383
        %s388 = sld [smem:[#allocation8 + $0x9]]
        %v389 = vstv %s388
        %v390 = vmul.f32 %v367, %v389
        %v391 = vmul.f32 %v368, %v389
        %394 = vrot.lane.b32.xlu0 %v390, 126
        %v395 = vpop.permute.xlu0 %394
        %396 = vrot.lane.b32.xlu0 %v391, 126
        %v397 = vpop.permute.xlu0 %396
        %v400 = vadd.f32 %v386, %v395
        %v401 = vadd.f32 %v387, %v397
        %s402 = sld [smem:[#allocation8 + $0xa]]
        %v403 = vstv %s402
        %v404 = vmul.f32 %v367, %v403
        %v405 = vmul.f32 %v368, %v403
        %408 = vrot.lane.b32.xlu0 %v404, 125
        %v409 = vpop.permute.xlu0 %408
        %410 = vrot.lane.b32.xlu0 %v405, 125
        %v411 = vpop.permute.xlu0 %410
        %v414 = vadd.f32 %v400, %v409
        %v415 = vadd.f32 %v401, %v411
        %s416 = sld [smem:[#allocation8 + $0xb]]
        %v417 = vstv %s416
        %v418 = vmul.f32 %v367, %v417
        %v419 = vmul.f32 %v368, %v417
        %422 = vrot.lane.b32.xlu0 %v418, 124
        %v423 = vpop.permute.xlu0 %422
        %424 = vrot.lane.b32.xlu0 %v419, 124
        %v425 = vpop.permute.xlu0 %424
        %v428 = vadd.f32 %v414, %v423
        %v429 = vadd.f32 %v415, %v425
        %s430 = sld [smem:[#allocation8 + $0xc]]
        %v431 = vstv %s430
        %v432 = vmul.f32 %v367, %v431
        %v433 = vmul.f32 %v368, %v431
        %436 = vrot.lane.b32.xlu0 %v432, 123
        %v437 = vpop.permute.xlu0 %436
        %438 = vrot.lane.b32.xlu0 %v433, 123
        %v439 = vpop.permute.xlu0 %438
        %v442 = vadd.f32 %v428, %v437
        %v443 = vadd.f32 %v429, %v439
        %s444 = sld [smem:[#allocation8 + $0xd]]
        %v445 = vstv %s444
        %v446 = vmul.f32 %v367, %v445
        %v447 = vmul.f32 %v368, %v445
        %450 = vrot.lane.b32.xlu0 %v446, 122
        %v451 = vpop.permute.xlu0 %450
        %452 = vrot.lane.b32.xlu0 %v447, 122
        %v453 = vpop.permute.xlu0 %452
        %v456 = vadd.f32 %v442, %v451
        %v457 = vadd.f32 %v443, %v453
        %s458 = sld [smem:[#allocation8 + $0xe]]
        %v459 = vld [vmem:[#allocation2 + $0x2] sm:$0xff]
        %v460 = vld [vmem:[#allocation2 + $0xa] sm:$0xff]
        %v461 = vstv %s458
        %v462 = vmul.f32 %v459, %v461
        %v463 = vmul.f32 %v460, %v461
        %v464 = vadd.f32 %v456, %v462
        %v465 = vadd.f32 %v457, %v463
        %s466 = sld [smem:[#allocation8 + $0xf]]
        %v467 = vstv %s466
        %v468 = vmul.f32 %v459, %v467
        %v469 = vmul.f32 %v460, %v467
        %472 = vrot.lane.b32.xlu0 %v468, 127
        %v473 = vpop.permute.xlu0 %472
        %474 = vrot.lane.b32.xlu0 %v469, 127
        %v475 = vpop.permute.xlu0 %474
        %v478 = vadd.f32 %v464, %v473
        %v479 = vadd.f32 %v465, %v475
        %s480 = sld [smem:[#allocation8 + $0x10]]
        %v481 = vstv %s480
        %v482 = vmul.f32 %v459, %v481
        %v483 = vmul.f32 %v460, %v481
        %486 = vrot.lane.b32.xlu0 %v482, 126
        %v487 = vpop.permute.xlu0 %486
        %488 = vrot.lane.b32.xlu0 %v483, 126
        %v489 = vpop.permute.xlu0 %488
        %v492 = vadd.f32 %v478, %v487
        %v493 = vadd.f32 %v479, %v489
        %s494 = sld [smem:[#allocation8 + $0x11]]
        %v495 = vstv %s494
        %v496 = vmul.f32 %v459, %v495
        %v497 = vmul.f32 %v460, %v495
        %500 = vrot.lane.b32.xlu0 %v496, 125
        %v501 = vpop.permute.xlu0 %500
        %502 = vrot.lane.b32.xlu0 %v497, 125
        %v503 = vpop.permute.xlu0 %502
        %v506 = vadd.f32 %v492, %v501
        %v507 = vadd.f32 %v493, %v503
        %s508 = sld [smem:[#allocation8 + $0x12]]
        %v509 = vstv %s508
        %v510 = vmul.f32 %v459, %v509
        %v511 = vmul.f32 %v460, %v509
        %514 = vrot.lane.b32.xlu0 %v510, 124
        %v515 = vpop.permute.xlu0 %514
        %516 = vrot.lane.b32.xlu0 %v511, 124
        %v517 = vpop.permute.xlu0 %516
        %v520 = vadd.f32 %v506, %v515
        %v521 = vadd.f32 %v507, %v517
        %s522 = sld [smem:[#allocation8 + $0x13]]
        %v523 = vstv %s522
        %v524 = vmul.f32 %v459, %v523
        %v525 = vmul.f32 %v460, %v523
        %528 = vrot.lane.b32.xlu0 %v524, 123
        %v529 = vpop.permute.xlu0 %528
        %530 = vrot.lane.b32.xlu0 %v525, 123
        %v531 = vpop.permute.xlu0 %530
        %v534 = vadd.f32 %v520, %v529
        %v535 = vadd.f32 %v521, %v531
        %s536 = sld [smem:[#allocation8 + $0x14]]
        %v537 = vstv %s536
        %v538 = vmul.f32 %v459, %v537
        %v539 = vmul.f32 %v460, %v537
        %542 = vrot.lane.b32.xlu0 %v538, 122
        %v543 = vpop.permute.xlu0 %542
        %544 = vrot.lane.b32.xlu0 %v539, 122
        %v545 = vpop.permute.xlu0 %544
        %v548 = vadd.f32 %v534, %v543
        %v549 = vadd.f32 %v535, %v545
        %s550 = sld [smem:[#allocation8 + $0x15]]
        %v551 = vld [vmem:[#allocation2 + $0x3] sm:$0xff]
        %v552 = vld [vmem:[#allocation2 + $0xb] sm:$0xff]
        %v553 = vstv %s550
        %v554 = vmul.f32 %v551, %v553
        %v555 = vmul.f32 %v552, %v553
        %v556 = vadd.f32 %v548, %v554
        %v557 = vadd.f32 %v549, %v555
        %s558 = sld [smem:[#allocation8 + $0x16]]
        %v559 = vstv %s558
        %v560 = vmul.f32 %v551, %v559
        %v561 = vmul.f32 %v552, %v559
        %564 = vrot.lane.b32.xlu0 %v560, 127
        %v565 = vpop.permute.xlu0 %564
        %566 = vrot.lane.b32.xlu0 %v561, 127
        %v567 = vpop.permute.xlu0 %566
        %v570 = vadd.f32 %v556, %v565
        %v571 = vadd.f32 %v557, %v567
        %s572 = sld [smem:[#allocation8 + $0x17]]
        %v573 = vstv %s572
        %v574 = vmul.f32 %v551, %v573
        %v575 = vmul.f32 %v552, %v573
        %578 = vrot.lane.b32.xlu0 %v574, 126
        %v579 = vpop.permute.xlu0 %578
        %580 = vrot.lane.b32.xlu0 %v575, 126
        %v581 = vpop.permute.xlu0 %580
        %v584 = vadd.f32 %v570, %v579
        %v585 = vadd.f32 %v571, %v581
        %s586 = sld [smem:[#allocation8 + $0x18]]
        %v587 = vstv %s586
        %v588 = vmul.f32 %v551, %v587
        %v589 = vmul.f32 %v552, %v587
        %592 = vrot.lane.b32.xlu0 %v588, 125
        %v593 = vpop.permute.xlu0 %592
        %594 = vrot.lane.b32.xlu0 %v589, 125
        %v595 = vpop.permute.xlu0 %594
        %v598 = vadd.f32 %v584, %v593
        %v599 = vadd.f32 %v585, %v595
        %s600 = sld [smem:[#allocation8 + $0x19]]
        %v601 = vstv %s600
        %v602 = vmul.f32 %v551, %v601
        %v603 = vmul.f32 %v552, %v601
        %606 = vrot.lane.b32.xlu0 %v602, 124
        %v607 = vpop.permute.xlu0 %606
        %608 = vrot.lane.b32.xlu0 %v603, 124
        %v609 = vpop.permute.xlu0 %608
        %v612 = vadd.f32 %v598, %v607
        %v613 = vadd.f32 %v599, %v609
        %s614 = sld [smem:[#allocation8 + $0x1a]]
        %v615 = vstv %s614
        %v616 = vmul.f32 %v551, %v615
        %v617 = vmul.f32 %v552, %v615
        %620 = vrot.lane.b32.xlu0 %v616, 123
        %v621 = vpop.permute.xlu0 %620
        %622 = vrot.lane.b32.xlu0 %v617, 123
        %v623 = vpop.permute.xlu0 %622
        %v626 = vadd.f32 %v612, %v621
        %v627 = vadd.f32 %v613, %v623
        %s628 = sld [smem:[#allocation8 + $0x1b]]
        %v629 = vstv %s628
        %v630 = vmul.f32 %v551, %v629
        %v631 = vmul.f32 %v552, %v629
        %634 = vrot.lane.b32.xlu0 %v630, 122
        %v635 = vpop.permute.xlu0 %634
        %636 = vrot.lane.b32.xlu0 %v631, 122
        %v637 = vpop.permute.xlu0 %636
        %v640 = vadd.f32 %v626, %v635
        %v641 = vadd.f32 %v627, %v637
        %s642 = sld [smem:[#allocation8 + $0x1c]]
        %v643 = vld [vmem:[#allocation2 + $0x4] sm:$0xff]
        %v644 = vld [vmem:[#allocation2 + $0xc] sm:$0xff]
        %v645 = vstv %s642
        %v646 = vmul.f32 %v643, %v645
        %v647 = vmul.f32 %v644, %v645
        %v648 = vadd.f32 %v646, 0.0
        %v649 = vadd.f32 %v647, 0.0
        %s650 = sld [smem:[#allocation8 + $0x1d]]
        %v651 = vstv %s650
        %v652 = vmul.f32 %v643, %v651
        %v653 = vmul.f32 %v644, %v651
        %656 = vrot.lane.b32.xlu0 %v652, 127
        %v657 = vpop.permute.xlu0 %656
        %658 = vrot.lane.b32.xlu0 %v653, 127
        %v659 = vpop.permute.xlu0 %658
        %v662 = vadd.f32 %v648, %v657
        %v663 = vadd.f32 %v649, %v659
        %s664 = sld [smem:[#allocation8 + $0x1e]]
        %v665 = vstv %s664
        %v666 = vmul.f32 %v643, %v665
        %v667 = vmul.f32 %v644, %v665
        %670 = vrot.lane.b32.xlu0 %v666, 126
        %v671 = vpop.permute.xlu0 %670
        %672 = vrot.lane.b32.xlu0 %v667, 126
        %v673 = vpop.permute.xlu0 %672
        %v676 = vadd.f32 %v662, %v671
        %v677 = vadd.f32 %v663, %v673
        %s678 = sld [smem:[#allocation8 + $0x1f]]
        %v679 = vstv %s678
        %v680 = vmul.f32 %v643, %v679
        %v681 = vmul.f32 %v644, %v679
        %684 = vrot.lane.b32.xlu0 %v680, 125
        %v685 = vpop.permute.xlu0 %684
        %686 = vrot.lane.b32.xlu0 %v681, 125
        %v687 = vpop.permute.xlu0 %686
        %v690 = vadd.f32 %v676, %v685
        %v691 = vadd.f32 %v677, %v687
        %s692 = sld [smem:[#allocation8 + $0x20]]
        %v693 = vstv %s692
        %v694 = vmul.f32 %v643, %v693
        %v695 = vmul.f32 %v644, %v693
        %698 = vrot.lane.b32.xlu0 %v694, 124
        %v699 = vpop.permute.xlu0 %698
        %700 = vrot.lane.b32.xlu0 %v695, 124
        %v701 = vpop.permute.xlu0 %700
        %v704 = vadd.f32 %v690, %v699
        %v705 = vadd.f32 %v691, %v701
        %s706 = sld [smem:[#allocation8 + $0x21]]
        %v707 = vstv %s706
        %v708 = vmul.f32 %v643, %v707
        %v709 = vmul.f32 %v644, %v707
        %712 = vrot.lane.b32.xlu0 %v708, 123
        %v713 = vpop.permute.xlu0 %712
        %714 = vrot.lane.b32.xlu0 %v709, 123
        %v715 = vpop.permute.xlu0 %714
        %v718 = vadd.f32 %v704, %v713
        %v719 = vadd.f32 %v705, %v715
        %s720 = sld [smem:[#allocation8 + $0x22]]
        %v721 = vstv %s720
        %v722 = vmul.f32 %v643, %v721
        %v723 = vmul.f32 %v644, %v721
        %726 = vrot.lane.b32.xlu0 %v722, 122
        %v727 = vpop.permute.xlu0 %726
        %728 = vrot.lane.b32.xlu0 %v723, 122
        %v729 = vpop.permute.xlu0 %728
        %v732 = vadd.f32 %v718, %v727
        %v733 = vadd.f32 %v719, %v729
        %s734 = sld [smem:[#allocation8 + $0x23]]
        %v735 = vld [vmem:[#allocation2 + $0x5] sm:$0xff]
        %v736 = vld [vmem:[#allocation2 + $0xd] sm:$0xff]
        %v737 = vstv %s734
        %v738 = vmul.f32 %v735, %v737
        %v739 = vmul.f32 %v736, %v737
        %v740 = vadd.f32 %v732, %v738
        %v741 = vadd.f32 %v733, %v739
        %s742 = sld [smem:[#allocation8 + $0x24]]
        %v743 = vstv %s742
        %v744 = vmul.f32 %v735, %v743
        %v745 = vmul.f32 %v736, %v743
        %748 = vrot.lane.b32.xlu0 %v744, 127
        %v749 = vpop.permute.xlu0 %748
        %750 = vrot.lane.b32.xlu0 %v745, 127
        %v751 = vpop.permute.xlu0 %750
        %v754 = vadd.f32 %v740, %v749
        %v755 = vadd.f32 %v741, %v751
        %s756 = sld [smem:[#allocation8 + $0x25]]
        %v757 = vstv %s756
        %v758 = vmul.f32 %v735, %v757
        %v759 = vmul.f32 %v736, %v757
        %762 = vrot.lane.b32.xlu0 %v758, 126
        %v763 = vpop.permute.xlu0 %762
        %764 = vrot.lane.b32.xlu0 %v759, 126
        %v765 = vpop.permute.xlu0 %764
        %v768 = vadd.f32 %v754, %v763
        %v769 = vadd.f32 %v755, %v765
        %s770 = sld [smem:[#allocation8 + $0x26]]
        %v771 = vstv %s770
        %v772 = vmul.f32 %v735, %v771
        %v773 = vmul.f32 %v736, %v771
        %776 = vrot.lane.b32.xlu0 %v772, 125
        %v777 = vpop.permute.xlu0 %776
        %778 = vrot.lane.b32.xlu0 %v773, 125
        %v779 = vpop.permute.xlu0 %778
        %v782 = vadd.f32 %v768, %v777
        %v783 = vadd.f32 %v769, %v779
        %s784 = sld [smem:[#allocation8 + $0x27]]
        %v785 = vstv %s784
        %v786 = vmul.f32 %v735, %v785
        %v787 = vmul.f32 %v736, %v785
        %790 = vrot.lane.b32.xlu0 %v786, 124
        %v791 = vpop.permute.xlu0 %790
        %792 = vrot.lane.b32.xlu0 %v787, 124
        %v793 = vpop.permute.xlu0 %792
        %v796 = vadd.f32 %v782, %v791
        %v797 = vadd.f32 %v783, %v793
        %s798 = sld [smem:[#allocation8 + $0x28]]
        %v799 = vstv %s798
        %v800 = vmul.f32 %v735, %v799
        %v801 = vmul.f32 %v736, %v799
        %804 = vrot.lane.b32.xlu0 %v800, 123
        %v805 = vpop.permute.xlu0 %804
        %806 = vrot.lane.b32.xlu0 %v801, 123
        %v807 = vpop.permute.xlu0 %806
        %v810 = vadd.f32 %v796, %v805
        %v811 = vadd.f32 %v797, %v807
        %s812 = sld [smem:[#allocation8 + $0x29]]
        %v813 = vstv %s812
        %v814 = vmul.f32 %v735, %v813
        %v815 = vmul.f32 %v736, %v813
        %818 = vrot.lane.b32.xlu0 %v814, 122
        %v819 = vpop.permute.xlu0 %818
        %820 = vrot.lane.b32.xlu0 %v815, 122
        %v821 = vpop.permute.xlu0 %820
        %v824 = vadd.f32 %v810, %v819
        %v825 = vadd.f32 %v811, %v821
        %s826 = sld [smem:[#allocation8 + $0x2a]]
        %v827 = vld [vmem:[#allocation2 + $0x6] sm:$0xff]
        %v828 = vld [vmem:[#allocation2 + $0xe] sm:$0xff]
        %v829 = vstv %s826
        %v830 = vmul.f32 %v827, %v829
        %v831 = vmul.f32 %v828, %v829
        %v832 = vadd.f32 %v824, %v830
        %v833 = vadd.f32 %v825, %v831
        %s834 = sld [smem:[#allocation8 + $0x2b]]
        %v835 = vstv %s834
        %v836 = vmul.f32 %v827, %v835
        %v837 = vmul.f32 %v828, %v835
        %840 = vrot.lane.b32.xlu0 %v836, 127
        %v841 = vpop.permute.xlu0 %840
        %842 = vrot.lane.b32.xlu0 %v837, 127
        %v843 = vpop.permute.xlu0 %842
        %v846 = vadd.f32 %v832, %v841
        %v847 = vadd.f32 %v833, %v843
        %s848 = sld [smem:[#allocation8 + $0x2c]]
        %v849 = vstv %s848
        %v850 = vmul.f32 %v827, %v849
        %v851 = vmul.f32 %v828, %v849
        %854 = vrot.lane.b32.xlu0 %v850, 126
        %v855 = vpop.permute.xlu0 %854
        %856 = vrot.lane.b32.xlu0 %v851, 126
        %v857 = vpop.permute.xlu0 %856
        %v860 = vadd.f32 %v846, %v855
        %v861 = vadd.f32 %v847, %v857
        %s862 = sld [smem:[#allocation8 + $0x2d]]
        %v863 = vstv %s862
        %v864 = vmul.f32 %v827, %v863
        %v865 = vmul.f32 %v828, %v863
        %868 = vrot.lane.b32.xlu0 %v864, 125
        %v869 = vpop.permute.xlu0 %868
        %870 = vrot.lane.b32.xlu0 %v865, 125
        %v871 = vpop.permute.xlu0 %870
        %v874 = vadd.f32 %v860, %v869
        %v875 = vadd.f32 %v861, %v871
        %s876 = sld [smem:[#allocation8 + $0x2e]]
        %v877 = vstv %s876
        %v878 = vmul.f32 %v827, %v877
        %v879 = vmul.f32 %v828, %v877
        %882 = vrot.lane.b32.xlu0 %v878, 124
        %v883 = vpop.permute.xlu0 %882
        %884 = vrot.lane.b32.xlu0 %v879, 124
        %v885 = vpop.permute.xlu0 %884
        %v888 = vadd.f32 %v874, %v883
        %v889 = vadd.f32 %v875, %v885
        %s890 = sld [smem:[#allocation8 + $0x2f]]
        %v891 = vstv %s890
        %v892 = vmul.f32 %v827, %v891
        %v893 = vmul.f32 %v828, %v891
        %896 = vrot.lane.b32.xlu0 %v892, 123
        %v897 = vpop.permute.xlu0 %896
        %898 = vrot.lane.b32.xlu0 %v893, 123
        %v899 = vpop.permute.xlu0 %898
        %v902 = vadd.f32 %v888, %v897
        %v903 = vadd.f32 %v889, %v899
        %s904 = sld [smem:[#allocation8 + $0x30]]
        %v905 = vstv %s904
        %v906 = vmul.f32 %v827, %v905
        %v907 = vmul.f32 %v828, %v905
        %910 = vrot.lane.b32.xlu0 %v906, 122
        %v911 = vpop.permute.xlu0 %910
        %912 = vrot.lane.b32.xlu0 %v907, 122
        %v913 = vpop.permute.xlu0 %912
        %v916 = vadd.f32 %v902, %v911
        %v917 = vadd.f32 %v903, %v913
        %s918 = sld [smem:[#allocation8 + $0x31]]
        %v919 = vld [vmem:[%s270] sm:$0xff]
        %v920 = vld [vmem:[%s270 + $0x8] sm:$0xff]
        %v921 = vstv %s918
        %v922 = vmul.f32 %v919, %v921
        %v923 = vmul.f32 %v920, %v921
        %v924 = vadd.f32 %v922, 0.0
        %v925 = vadd.f32 %v923, 0.0
        %s926 = sld [smem:[#allocation8 + $0x32]]
        %v927 = vstv %s926
        %v928 = vmul.f32 %v919, %v927
        %v929 = vmul.f32 %v920, %v927
        %932 = vrot.lane.b32.xlu0 %v928, 127
        %v933 = vpop.permute.xlu0 %932
        %934 = vrot.lane.b32.xlu0 %v929, 127
        %v935 = vpop.permute.xlu0 %934
        %v938 = vadd.f32 %v924, %v933
        %v939 = vadd.f32 %v925, %v935
        %s940 = sld [smem:[#allocation8 + $0x33]]
        %v941 = vstv %s940
        %v942 = vmul.f32 %v919, %v941
        %v943 = vmul.f32 %v920, %v941
        %946 = vrot.lane.b32.xlu0 %v942, 126
        %v947 = vpop.permute.xlu0 %946
        %948 = vrot.lane.b32.xlu0 %v943, 126
        %v949 = vpop.permute.xlu0 %948
        %v952 = vadd.f32 %v938, %v947
        %v953 = vadd.f32 %v939, %v949
        %s954 = sld [smem:[#allocation8 + $0x34]]
        %v955 = vstv %s954
        %v956 = vmul.f32 %v919, %v955
        %v957 = vmul.f32 %v920, %v955
        %960 = vrot.lane.b32.xlu0 %v956, 125
        %v961 = vpop.permute.xlu0 %960
        %962 = vrot.lane.b32.xlu0 %v957, 125
        %v963 = vpop.permute.xlu0 %962
        %v966 = vadd.f32 %v952, %v961
        %v967 = vadd.f32 %v953, %v963
        %s968 = sld [smem:[#allocation8 + $0x35]]
        %v969 = vstv %s968
        %v970 = vmul.f32 %v919, %v969
        %v971 = vmul.f32 %v920, %v969
        %974 = vrot.lane.b32.xlu0 %v970, 124
        %v975 = vpop.permute.xlu0 %974
        %976 = vrot.lane.b32.xlu0 %v971, 124
        %v977 = vpop.permute.xlu0 %976
        %v980 = vadd.f32 %v966, %v975
        %v981 = vadd.f32 %v967, %v977
        %s982 = sld [smem:[#allocation8 + $0x36]]
        %v983 = vstv %s982
        %v984 = vmul.f32 %v919, %v983
        %v985 = vmul.f32 %v920, %v983
        %988 = vrot.lane.b32.xlu0 %v984, 123
        %v989 = vpop.permute.xlu0 %988
        %990 = vrot.lane.b32.xlu0 %v985, 123
        %v991 = vpop.permute.xlu0 %990
        %v994 = vadd.f32 %v980, %v989
        %v995 = vadd.f32 %v981, %v991
        %s996 = sld [smem:[#allocation8 + $0x37]]
        %v997 = vstv %s996
        %v998 = vmul.f32 %v919, %v997
        %v999 = vmul.f32 %v920, %v997
        %1002 = vrot.lane.b32.xlu0 %v998, 122
        %v1003 = vpop.permute.xlu0 %1002
        %1004 = vrot.lane.b32.xlu0 %v999, 122
        %v1005 = vpop.permute.xlu0 %1004
        %v1008 = vadd.f32 %v994, %v1003
        %v1009 = vadd.f32 %v995, %v1005
        %s1010 = sld [smem:[#allocation8 + $0x38]]
        %v1011 = vld [vmem:[%s270 + $0x1] sm:$0xff]
        %v1012 = vld [vmem:[%s270 + $0x9] sm:$0xff]
        %v1013 = vstv %s1010
        %v1014 = vmul.f32 %v1011, %v1013
        %v1015 = vmul.f32 %v1012, %v1013
        %v1016 = vadd.f32 %v1008, %v1014
        %v1017 = vadd.f32 %v1009, %v1015
        %s1018 = sld [smem:[#allocation8 + $0x39]]
        %v1019 = vstv %s1018
        %v1020 = vmul.f32 %v1011, %v1019
        %v1021 = vmul.f32 %v1012, %v1019
        %1024 = vrot.lane.b32.xlu0 %v1020, 127
        %v1025 = vpop.permute.xlu0 %1024
        %1026 = vrot.lane.b32.xlu0 %v1021, 127
        %v1027 = vpop.permute.xlu0 %1026
        %v1030 = vadd.f32 %v1016, %v1025
        %v1031 = vadd.f32 %v1017, %v1027
        %s1032 = sld [smem:[#allocation8 + $0x3a]]
        %v1033 = vstv %s1032
        %v1034 = vmul.f32 %v1011, %v1033
        %v1035 = vmul.f32 %v1012, %v1033
        %1038 = vrot.lane.b32.xlu0 %v1034, 126
        %v1039 = vpop.permute.xlu0 %1038
        %1040 = vrot.lane.b32.xlu0 %v1035, 126
        %v1041 = vpop.permute.xlu0 %1040
        %v1044 = vadd.f32 %v1030, %v1039
        %v1045 = vadd.f32 %v1031, %v1041
        %s1046 = sld [smem:[#allocation8 + $0x3b]]
        %v1047 = vstv %s1046
        %v1048 = vmul.f32 %v1011, %v1047
        %v1049 = vmul.f32 %v1012, %v1047
        %1052 = vrot.lane.b32.xlu0 %v1048, 125
        %v1053 = vpop.permute.xlu0 %1052
        %1054 = vrot.lane.b32.xlu0 %v1049, 125
        %v1055 = vpop.permute.xlu0 %1054
        %v1058 = vadd.f32 %v1044, %v1053
        %v1059 = vadd.f32 %v1045, %v1055
        %s1060 = sld [smem:[#allocation8 + $0x3c]]
        %v1061 = vstv %s1060
        %v1062 = vmul.f32 %v1011, %v1061
        %v1063 = vmul.f32 %v1012, %v1061
        %1066 = vrot.lane.b32.xlu0 %v1062, 124
        %v1067 = vpop.permute.xlu0 %1066
        %1068 = vrot.lane.b32.xlu0 %v1063, 124
        %v1069 = vpop.permute.xlu0 %1068
        %v1072 = vadd.f32 %v1058, %v1067
        %v1073 = vadd.f32 %v1059, %v1069
        %s1074 = sld [smem:[#allocation8 + $0x3d]]
        %v1075 = vstv %s1074
        %v1076 = vmul.f32 %v1011, %v1075
        %v1077 = vmul.f32 %v1012, %v1075
        %1080 = vrot.lane.b32.xlu0 %v1076, 123
        %v1081 = vpop.permute.xlu0 %1080
        %1082 = vrot.lane.b32.xlu0 %v1077, 123
        %v1083 = vpop.permute.xlu0 %1082
        %v1086 = vadd.f32 %v1072, %v1081
        %v1087 = vadd.f32 %v1073, %v1083
        %s1088 = sld [smem:[#allocation8 + $0x3e]]
        %v1089 = vstv %s1088
        %v1090 = vmul.f32 %v1011, %v1089
        %v1091 = vmul.f32 %v1012, %v1089
        %1094 = vrot.lane.b32.xlu0 %v1090, 122
        %v1095 = vpop.permute.xlu0 %1094
        %1096 = vrot.lane.b32.xlu0 %v1091, 122
        %v1097 = vpop.permute.xlu0 %1096
        %v1100 = vadd.f32 %v1086, %v1095
        %v1101 = vadd.f32 %v1087, %v1097
        %s1102 = sld [smem:[#allocation8 + $0x3f]]
        %v1103 = vld [vmem:[%s270 + $0x2] sm:$0xff]
        %v1104 = vld [vmem:[%s270 + $0xa] sm:$0xff]
        %v1105 = vstv %s1102
        %v1106 = vmul.f32 %v1103, %v1105
        %v1107 = vmul.f32 %v1104, %v1105
        %v1108 = vadd.f32 %v1100, %v1106
        %v1109 = vadd.f32 %v1101, %v1107
        %s1110 = sld [smem:[#allocation8 + $0x40]]
        %v1111 = vstv %s1110
        %v1112 = vmul.f32 %v1103, %v1111
        %v1113 = vmul.f32 %v1104, %v1111
        %1116 = vrot.lane.b32.xlu0 %v1112, 127
        %v1117 = vpop.permute.xlu0 %1116
        %1118 = vrot.lane.b32.xlu0 %v1113, 127
        %v1119 = vpop.permute.xlu0 %1118
        %v1122 = vadd.f32 %v1108, %v1117
        %v1123 = vadd.f32 %v1109, %v1119
        %s1124 = sld [smem:[#allocation8 + $0x41]]
        %v1125 = vstv %s1124
        %v1126 = vmul.f32 %v1103, %v1125
        %v1127 = vmul.f32 %v1104, %v1125
        %1130 = vrot.lane.b32.xlu0 %v1126, 126
        %v1131 = vpop.permute.xlu0 %1130
        %1132 = vrot.lane.b32.xlu0 %v1127, 126
        %v1133 = vpop.permute.xlu0 %1132
        %v1136 = vadd.f32 %v1122, %v1131
        %v1137 = vadd.f32 %v1123, %v1133
        %s1138 = sld [smem:[#allocation8 + $0x42]]
        %v1139 = vstv %s1138
        %v1140 = vmul.f32 %v1103, %v1139
        %v1141 = vmul.f32 %v1104, %v1139
        %1144 = vrot.lane.b32.xlu0 %v1140, 125
        %v1145 = vpop.permute.xlu0 %1144
        %1146 = vrot.lane.b32.xlu0 %v1141, 125
        %v1147 = vpop.permute.xlu0 %1146
        %v1150 = vadd.f32 %v1136, %v1145
        %v1151 = vadd.f32 %v1137, %v1147
        %s1152 = sld [smem:[#allocation8 + $0x43]]
        %v1153 = vstv %s1152
        %v1154 = vmul.f32 %v1103, %v1153
        %v1155 = vmul.f32 %v1104, %v1153
        %1158 = vrot.lane.b32.xlu0 %v1154, 124
        %v1159 = vpop.permute.xlu0 %1158
        %1160 = vrot.lane.b32.xlu0 %v1155, 124
        %v1161 = vpop.permute.xlu0 %1160
        %v1164 = vadd.f32 %v1150, %v1159
        %v1165 = vadd.f32 %v1151, %v1161
        %s1166 = sld [smem:[#allocation8 + $0x44]]
        %v1167 = vstv %s1166
        %v1168 = vmul.f32 %v1103, %v1167
        %v1169 = vmul.f32 %v1104, %v1167
        %1172 = vrot.lane.b32.xlu0 %v1168, 123
        %v1173 = vpop.permute.xlu0 %1172
        %1174 = vrot.lane.b32.xlu0 %v1169, 123
        %v1175 = vpop.permute.xlu0 %1174
        %v1178 = vadd.f32 %v1164, %v1173
        %v1179 = vadd.f32 %v1165, %v1175
        %s1180 = sld [smem:[#allocation8 + $0x45]]
        %v1181 = vstv %s1180
        %v1182 = vmul.f32 %v1103, %v1181
        %v1183 = vmul.f32 %v1104, %v1181
        %1186 = vrot.lane.b32.xlu0 %v1182, 122
        %v1187 = vpop.permute.xlu0 %1186
        %1188 = vrot.lane.b32.xlu0 %v1183, 122
        %v1189 = vpop.permute.xlu0 %1188
        %v1192 = vadd.f32 %v1178, %v1187
        %v1193 = vadd.f32 %v1179, %v1189
        %s1194 = sld [smem:[#allocation8 + $0x46]]
        %v1195 = vld [vmem:[%s270 + $0x3] sm:$0xff]
        %v1196 = vld [vmem:[%s270 + $0xb] sm:$0xff]
        %v1197 = vstv %s1194
        %v1198 = vmul.f32 %v1195, %v1197
        %v1199 = vmul.f32 %v1196, %v1197
        %v1200 = vadd.f32 %v1192, %v1198
        %v1201 = vadd.f32 %v1193, %v1199
        %s1202 = sld [smem:[#allocation8 + $0x47]]
        %v1203 = vstv %s1202
        %v1204 = vmul.f32 %v1195, %v1203
        %v1205 = vmul.f32 %v1196, %v1203
        %1208 = vrot.lane.b32.xlu0 %v1204, 127
        %v1209 = vpop.permute.xlu0 %1208
        %1210 = vrot.lane.b32.xlu0 %v1205, 127
        %v1211 = vpop.permute.xlu0 %1210
        %v1214 = vadd.f32 %v1200, %v1209
        %v1215 = vadd.f32 %v1201, %v1211
        %s1216 = sld [smem:[#allocation8 + $0x48]]
        %v1217 = vstv %s1216
        %v1218 = vmul.f32 %v1195, %v1217
        %v1219 = vmul.f32 %v1196, %v1217
        %1222 = vrot.lane.b32.xlu0 %v1218, 126
        %v1223 = vpop.permute.xlu0 %1222
        %1224 = vrot.lane.b32.xlu0 %v1219, 126
        %v1225 = vpop.permute.xlu0 %1224
        %v1228 = vadd.f32 %v1214, %v1223
        %v1229 = vadd.f32 %v1215, %v1225
        %s1230 = sld [smem:[#allocation8 + $0x49]]
        %v1231 = vstv %s1230
        %v1232 = vmul.f32 %v1195, %v1231
        %v1233 = vmul.f32 %v1196, %v1231
        %1236 = vrot.lane.b32.xlu0 %v1232, 125
        %v1237 = vpop.permute.xlu0 %1236
        %1238 = vrot.lane.b32.xlu0 %v1233, 125
        %v1239 = vpop.permute.xlu0 %1238
        %v1242 = vadd.f32 %v1228, %v1237
        %v1243 = vadd.f32 %v1229, %v1239
        %s1244 = sld [smem:[#allocation8 + $0x4a]]
        %v1245 = vstv %s1244
        %v1246 = vmul.f32 %v1195, %v1245
        %v1247 = vmul.f32 %v1196, %v1245
        %1250 = vrot.lane.b32.xlu0 %v1246, 124
        %v1251 = vpop.permute.xlu0 %1250
        %1252 = vrot.lane.b32.xlu0 %v1247, 124
        %v1253 = vpop.permute.xlu0 %1252
        %v1256 = vadd.f32 %v1242, %v1251
        %v1257 = vadd.f32 %v1243, %v1253
        %s1258 = sld [smem:[#allocation8 + $0x4b]]
        %v1259 = vstv %s1258
        %v1260 = vmul.f32 %v1195, %v1259
        %v1261 = vmul.f32 %v1196, %v1259
        %1264 = vrot.lane.b32.xlu0 %v1260, 123
        %v1265 = vpop.permute.xlu0 %1264
        %1266 = vrot.lane.b32.xlu0 %v1261, 123
        %v1267 = vpop.permute.xlu0 %1266
        %v1270 = vadd.f32 %v1256, %v1265
        %v1271 = vadd.f32 %v1257, %v1267
        %s1272 = sld [smem:[#allocation8 + $0x4c]]
        %v1273 = vstv %s1272
        %v1274 = vmul.f32 %v1195, %v1273
        %v1275 = vmul.f32 %v1196, %v1273
        %1278 = vrot.lane.b32.xlu0 %v1274, 122
        %v1279 = vpop.permute.xlu0 %1278
        %1280 = vrot.lane.b32.xlu0 %v1275, 122
        %v1281 = vpop.permute.xlu0 %1280
        %v1284 = vadd.f32 %v1270, %v1279
        %v1285 = vadd.f32 %v1271, %v1281
        %s1286 = sld [smem:[#allocation8 + $0x4d]]
        %v1287 = vld [vmem:[%s270 + $0x4] sm:$0xff]
        %v1288 = vld [vmem:[%s270 + $0xc] sm:$0xff]
        %v1289 = vstv %s1286
        %v1290 = vmul.f32 %v1287, %v1289
        %v1291 = vmul.f32 %v1288, %v1289
        %v1292 = vadd.f32 %v1290, 0.0
        %v1293 = vadd.f32 %v1291, 0.0
        %s1294 = sld [smem:[#allocation8 + $0x4e]]
        %v1295 = vstv %s1294
        %v1296 = vmul.f32 %v1287, %v1295
        %v1297 = vmul.f32 %v1288, %v1295
        %1300 = vrot.lane.b32.xlu0 %v1296, 127
        %v1301 = vpop.permute.xlu0 %1300
        %1302 = vrot.lane.b32.xlu0 %v1297, 127
        %v1303 = vpop.permute.xlu0 %1302
        %v1306 = vadd.f32 %v1292, %v1301
        %v1307 = vadd.f32 %v1293, %v1303
        %s1308 = sld [smem:[#allocation8 + $0x4f]]
        %v1309 = vstv %s1308
        %v1310 = vmul.f32 %v1287, %v1309
        %v1311 = vmul.f32 %v1288, %v1309
        %1314 = vrot.lane.b32.xlu0 %v1310, 126
        %v1315 = vpop.permute.xlu0 %1314
        %1316 = vrot.lane.b32.xlu0 %v1311, 126
        %v1317 = vpop.permute.xlu0 %1316
        %v1320 = vadd.f32 %v1306, %v1315
        %v1321 = vadd.f32 %v1307, %v1317
        %s1322 = sld [smem:[#allocation8 + $0x50]]
        %v1323 = vstv %s1322
        %v1324 = vmul.f32 %v1287, %v1323
        %v1325 = vmul.f32 %v1288, %v1323
        %1328 = vrot.lane.b32.xlu0 %v1324, 125
        %v1329 = vpop.permute.xlu0 %1328
        %1330 = vrot.lane.b32.xlu0 %v1325, 125
        %v1331 = vpop.permute.xlu0 %1330
        %v1334 = vadd.f32 %v1320, %v1329
        %v1335 = vadd.f32 %v1321, %v1331
        %s1336 = sld [smem:[#allocation8 + $0x51]]
        %v1337 = vstv %s1336
        %v1338 = vmul.f32 %v1287, %v1337
        %v1339 = vmul.f32 %v1288, %v1337
        %1342 = vrot.lane.b32.xlu0 %v1338, 124
        %v1343 = vpop.permute.xlu0 %1342
        %1344 = vrot.lane.b32.xlu0 %v1339, 124
        %v1345 = vpop.permute.xlu0 %1344
        %v1348 = vadd.f32 %v1334, %v1343
        %v1349 = vadd.f32 %v1335, %v1345
        %s1350 = sld [smem:[#allocation8 + $0x52]]
        %v1351 = vstv %s1350
        %v1352 = vmul.f32 %v1287, %v1351
        %v1353 = vmul.f32 %v1288, %v1351
        %1356 = vrot.lane.b32.xlu0 %v1352, 123
        %v1357 = vpop.permute.xlu0 %1356
        %1358 = vrot.lane.b32.xlu0 %v1353, 123
        %v1359 = vpop.permute.xlu0 %1358
        %v1362 = vadd.f32 %v1348, %v1357
        %v1363 = vadd.f32 %v1349, %v1359
        %s1364 = sld [smem:[#allocation8 + $0x53]]
        %v1365 = vstv %s1364
        %v1366 = vmul.f32 %v1287, %v1365
        %v1367 = vmul.f32 %v1288, %v1365
        %1370 = vrot.lane.b32.xlu0 %v1366, 122
        %v1371 = vpop.permute.xlu0 %1370
        %1372 = vrot.lane.b32.xlu0 %v1367, 122
        %v1373 = vpop.permute.xlu0 %1372
        %v1376 = vadd.f32 %v1362, %v1371
        %v1377 = vadd.f32 %v1363, %v1373
        %s1378 = sld [smem:[#allocation8 + $0x54]]
        %v1379 = vld [vmem:[%s270 + $0x5] sm:$0xff]
        %v1380 = vld [vmem:[%s270 + $0xd] sm:$0xff]
        %v1381 = vstv %s1378
        %v1382 = vmul.f32 %v1379, %v1381
        %v1383 = vmul.f32 %v1380, %v1381
        %v1384 = vadd.f32 %v1376, %v1382
        %v1385 = vadd.f32 %v1377, %v1383
        %s1386 = sld [smem:[#allocation8 + $0x55]]
        %v1387 = vstv %s1386
        %v1388 = vmul.f32 %v1379, %v1387
        %v1389 = vmul.f32 %v1380, %v1387
        %1392 = vrot.lane.b32.xlu0 %v1388, 127
        %v1393 = vpop.permute.xlu0 %1392
        %1394 = vrot.lane.b32.xlu0 %v1389, 127
        %v1395 = vpop.permute.xlu0 %1394
        %v1398 = vadd.f32 %v1384, %v1393
        %v1399 = vadd.f32 %v1385, %v1395
        %s1400 = sld [smem:[#allocation8 + $0x56]]
        %v1401 = vstv %s1400
        %v1402 = vmul.f32 %v1379, %v1401
        %v1403 = vmul.f32 %v1380, %v1401
        %1406 = vrot.lane.b32.xlu0 %v1402, 126
        %v1407 = vpop.permute.xlu0 %1406
        %1408 = vrot.lane.b32.xlu0 %v1403, 126
        %v1409 = vpop.permute.xlu0 %1408
        %v1412 = vadd.f32 %v1398, %v1407
        %v1413 = vadd.f32 %v1399, %v1409
        %s1414 = sld [smem:[#allocation8 + $0x57]]
        %v1415 = vstv %s1414
        %v1416 = vmul.f32 %v1379, %v1415
        %v1417 = vmul.f32 %v1380, %v1415
        %1420 = vrot.lane.b32.xlu0 %v1416, 125
        %v1421 = vpop.permute.xlu0 %1420
        %1422 = vrot.lane.b32.xlu0 %v1417, 125
        %v1423 = vpop.permute.xlu0 %1422
        %v1426 = vadd.f32 %v1412, %v1421
        %v1427 = vadd.f32 %v1413, %v1423
        %s1428 = sld [smem:[#allocation8 + $0x58]]
        %v1429 = vstv %s1428
        %v1430 = vmul.f32 %v1379, %v1429
        %v1431 = vmul.f32 %v1380, %v1429
        %1434 = vrot.lane.b32.xlu0 %v1430, 124
        %v1435 = vpop.permute.xlu0 %1434
        %1436 = vrot.lane.b32.xlu0 %v1431, 124
        %v1437 = vpop.permute.xlu0 %1436
        %v1440 = vadd.f32 %v1426, %v1435
        %v1441 = vadd.f32 %v1427, %v1437
        %s1442 = sld [smem:[#allocation8 + $0x59]]
        %v1443 = vstv %s1442
        %v1444 = vmul.f32 %v1379, %v1443
        %v1445 = vmul.f32 %v1380, %v1443
        %1448 = vrot.lane.b32.xlu0 %v1444, 123
        %v1449 = vpop.permute.xlu0 %1448
        %1450 = vrot.lane.b32.xlu0 %v1445, 123
        %v1451 = vpop.permute.xlu0 %1450
        %v1454 = vadd.f32 %v1440, %v1449
        %v1455 = vadd.f32 %v1441, %v1451
        %s1456 = sld [smem:[#allocation8 + $0x5a]]
        %v1457 = vstv %s1456
        %v1458 = vmul.f32 %v1379, %v1457
        %v1459 = vmul.f32 %v1380, %v1457
        %1462 = vrot.lane.b32.xlu0 %v1458, 122
        %v1463 = vpop.permute.xlu0 %1462
        %1464 = vrot.lane.b32.xlu0 %v1459, 122
        %v1465 = vpop.permute.xlu0 %1464
        %v1468 = vadd.f32 %v1454, %v1463
        %v1469 = vadd.f32 %v1455, %v1465
        %s1470 = sld [smem:[#allocation8 + $0x5b]]
        %v1471 = vld [vmem:[%s270 + $0x6] sm:$0xff]
        %v1472 = vld [vmem:[%s270 + $0xe] sm:$0xff]
        %v1473 = vstv %s1470
        %v1474 = vmul.f32 %v1471, %v1473
        %v1475 = vmul.f32 %v1472, %v1473
        %v1476 = vadd.f32 %v1468, %v1474
        %v1477 = vadd.f32 %v1469, %v1475
        %s1478 = sld [smem:[#allocation8 + $0x5c]]
        %v1479 = vstv %s1478
        %v1480 = vmul.f32 %v1471, %v1479
        %v1481 = vmul.f32 %v1472, %v1479
        %1484 = vrot.lane.b32.xlu0 %v1480, 127
        %v1485 = vpop.permute.xlu0 %1484
        %1486 = vrot.lane.b32.xlu0 %v1481, 127
        %v1487 = vpop.permute.xlu0 %1486
        %v1490 = vadd.f32 %v1476, %v1485
        %v1491 = vadd.f32 %v1477, %v1487
        %s1492 = sld [smem:[#allocation8 + $0x5d]]
        %v1493 = vstv %s1492
        %v1494 = vmul.f32 %v1471, %v1493
        %v1495 = vmul.f32 %v1472, %v1493
        %1498 = vrot.lane.b32.xlu0 %v1494, 126
        %v1499 = vpop.permute.xlu0 %1498
        %1500 = vrot.lane.b32.xlu0 %v1495, 126
        %v1501 = vpop.permute.xlu0 %1500
        %v1504 = vadd.f32 %v1490, %v1499
        %v1505 = vadd.f32 %v1491, %v1501
        %s1506 = sld [smem:[#allocation8 + $0x5e]]
        %v1507 = vstv %s1506
        %v1508 = vmul.f32 %v1471, %v1507
        %v1509 = vmul.f32 %v1472, %v1507
        %1512 = vrot.lane.b32.xlu0 %v1508, 125
        %v1513 = vpop.permute.xlu0 %1512
        %1514 = vrot.lane.b32.xlu0 %v1509, 125
        %v1515 = vpop.permute.xlu0 %1514
        %v1518 = vadd.f32 %v1504, %v1513
        %v1519 = vadd.f32 %v1505, %v1515
        %s1520 = sld [smem:[#allocation8 + $0x5f]]
        %v1521 = vstv %s1520
        %v1522 = vmul.f32 %v1471, %v1521
        %v1523 = vmul.f32 %v1472, %v1521
        %1526 = vrot.lane.b32.xlu0 %v1522, 124
        %v1527 = vpop.permute.xlu0 %1526
        %1528 = vrot.lane.b32.xlu0 %v1523, 124
        %v1529 = vpop.permute.xlu0 %1528
        %v1532 = vadd.f32 %v1518, %v1527
        %v1533 = vadd.f32 %v1519, %v1529
        %s1534 = sld [smem:[#allocation8 + $0x60]]
        %v1535 = vstv %s1534
        %v1536 = vmul.f32 %v1471, %v1535
        %v1537 = vmul.f32 %v1472, %v1535
        %1540 = vrot.lane.b32.xlu0 %v1536, 123
        %v1541 = vpop.permute.xlu0 %1540
        %1542 = vrot.lane.b32.xlu0 %v1537, 123
        %v1543 = vpop.permute.xlu0 %1542
        %v1546 = vadd.f32 %v1532, %v1541
        %v1547 = vadd.f32 %v1533, %v1543
        %s1548 = sld [smem:[#allocation8 + $0x61]]
        %v1549 = vstv %s1548
        %v1550 = vmul.f32 %v1471, %v1549
        %v1551 = vmul.f32 %v1472, %v1549
        %1554 = vrot.lane.b32.xlu0 %v1550, 122
        %v1555 = vpop.permute.xlu0 %1554
        %1556 = vrot.lane.b32.xlu0 %v1551, 122
        %v1557 = vpop.permute.xlu0 %1556
        %v1560 = vadd.f32 %v1546, %v1555
        %v1561 = vadd.f32 %v1547, %v1557
        %v1562 = vadd.f32 %v640, %v916
        %v1563 = vadd.f32 %v641, %v917
        %v1564 = vadd.f32 %v1284, %v1560
        %v1565 = vadd.f32 %v1285, %v1561
        %v1566 = vadd.f32 %v1562, %v1564
        %v1567 = vadd.f32 %v1563, %v1565
        %v1568 = vstv %s273
        %v1569 = vadd.f32 %v1566, %v1568
        %v1570 = vadd.f32 %v1567, %v1568
        %v1571 = vxor.u32 %v1569, 2147483648
        %v1572 = vxor.u32 %v1570, 2147483648
        %v1573 = vmul.f32 %v1571, 1.442695
        %v1574 = vpow.pop %v1573
        %v1575 = vmul.f32 %v1572, 1.442695
        %v1576 = vpow.pop %v1575
        %v1577 = vadd.f32 %v1574, 1.0
        %v1578 = vadd.f32 %v1576, 1.0
        %v1579 = vrcp.pop %v1577
        %v1580 = vmul.f32 1.0, %v1579
        %v1581 = vrcp.pop %v1578
        %v1582 = vmul.f32 1.0, %v1581
        %v1583 = vmul.f32 %v204, %v1580
        %v1584 = vmul.f32 %v205, %v1582
        %v1585 = vmul.f32 %v206, %v1580
        %v1586 = vmul.f32 %v207, %v1582
        %v1587 = vmul.f32 %v208, %v1580
        %v1588 = vmul.f32 %v209, %v1582
        %v1589 = vmul.f32 %v210, %v1580
        %v1590 = vmul.f32 %v211, %v1582
        %1591 = vst.msk [vmem:[%s203] sm:$0xff] %vm212, %v1583
        %1592 = vst.msk [vmem:[%s203 + $0x8] sm:$0xff] %vm212, %v1584
        %1593 = vst.msk [vmem:[%s203 + $0x10] sm:$0xff] %vm212, %v1585
        %1594 = vst.msk [vmem:[%s203 + $0x18] sm:$0xff] %vm212, %v1586
        %1595 = vst.msk [vmem:[%s203 + $0x20] sm:$0xff] %vm212, %v1587
        %1596 = vst.msk [vmem:[%s203 + $0x28] sm:$0xff] %vm212, %v1588
        %1597 = vst.msk [vmem:[%s203 + $0x30] sm:$0xff] %vm212, %v1589
        %1598 = vst.msk [vmem:[%s203 + $0x38] sm:$0xff] %vm212, %v1590
        %s1599 = sand.u32 %s98, 1
        %s1600 = scalar_lea.sflag [#allocation6], %s1599
        %s1601 = sand.u32 %s98, 1
        %s1602 = smul.addr %s1601, 64
        %s1603 = scalar_lea.vmem [#allocation9], %s1602
        // Predicated region
        $region41: #{tpu_custom_call.1} parent=31 // pred_check
          %p1604 = pneg %p108
        $region42: #{tpu_custom_call.1} parent=31 // pred_check_branch
          %1606 = sbr.rel (%p1604) target = $region44
        $region43: #{tpu_custom_call.1} parent=31 // pred_region
          %s1608 = ssub.s32 1024, 1024
          %1609 = vsyncadd %s1600, %s1608
          %s1610 = smul.addr %s22, 8
          %s1611 = smul.addr %s1610, 128
          %s1612 = scalar_lea.hbm %s3, %s1611
          %s1613 = sshll.u32 %s1603, 4
          %s1614 = int_to_ptr.vmem [resolvable:$true] %s1613
          %1619 = dma.vmem_to_hbm [thread:$0]  %s1614, 1024, %s1612, %s1600, 128, 128, 8
        $region44: #{tpu_custom_call.1} parent=31 // pred_fallthru
          _
      $region32: #{tpu_custom_call.1} parent=5 // pred_fallthru
        _
      %p1620 = scmp.le.s32.totalorder 2, %s17
      // Predicated region
      $region45: #{tpu_custom_call.1} parent=5 // pred_check
        %p1621 = pneg %p1620
      $region46: #{tpu_custom_call.1} parent=5 // pred_check_branch
        %1623 = sbr.rel (%p1621) target = $region48
      $region47: #{tpu_custom_call.1} parent=5 // pred_region
        %s1624 = ssub.s32 %s17, 2
        // Predicated region
        $region49: #{tpu_custom_call.1} parent=47 // pred_check
          %p1625 = pneg %p114
        $region50: #{tpu_custom_call.1} parent=47 // pred_check_branch
          %1627 = sbr.rel (%p1625) target = $region52
        $region51: #{tpu_custom_call.1} parent=47 // pred_region
          %s1628 = sand.u32 %s99, 1
          %s1629 = scalar_lea.sflag [#allocation6], %s1628
          %s1630 = sand.u32 %s99, 1
          %s1631 = smul.addr %s1630, 64
          %s1632 = scalar_lea.vmem [#allocation9], %s1631
          %1633 = dma.done %s1629, 1024
        $region52: #{tpu_custom_call.1} parent=47 // pred_fallthru
          _
      $region48: #{tpu_custom_call.1} parent=5 // pred_fallthru
        _
    $region6: #{tpu_custom_call.1} parent=1 // loop_footer
      %s21 = sadd.s32 1, %s17
    $region7: #{tpu_custom_call.1} parent=1 // loop_footer_branch
      %16 = sbr.rel target = $region3
    $region8: #{tpu_custom_call.1} parent=1 // loop_exit
      _
    %1634 = vsyncpa [#allocation5], 1
    %s1635 = scalar_lea.sflag [#allocation5], 1
    %1636 = vsyncpa %s1635, 1
    %1637 = vsyncpa [#allocation6], 1
    %s1638 = scalar_lea.sflag [#allocation6], 1
    %1639 = vsyncpa %s1638, 1
    %1640 = vsyncpa [#allocation7], 1
    %s1641 = scalar_lea.sflag [#allocation7], 1
    %1642 = vsyncpa %s1641, 1

</llo_original>
